<compile_context>
chip_gen: v7x
topology: tpu7x:2x2x1
jax: 0.10.0
libtpu: 0.0.40
codegen_flags: <defaults>
</compile_context>

<pallas_src>
import jax
import jax.numpy as jnp
from jax import lax
from jax.experimental import pallas as pl
from jax.experimental.pallas import tpu as pltpu


def _disc_kernel(traj_ref, wx_ref, bx_ref, whh_ref, w1_hbm, b1_ref,
                 w2_ref, b2_ref, out_ref, gx_scratch, w1_vmem, w1_sem):
    B = out_ref.shape[0]
    S = traj_ref.shape[0] // B
    H = whh_ref.shape[0]

    # --- kick off the W1 DMA now; it hides behind the whole recurrence ------
    w1_cp = pltpu.make_async_copy(w1_hbm, w1_vmem, w1_sem)
    w1_cp.start()

    # --- x-path gate pre-activations for all steps, spilled to VMEM scratch -
    # (pure VPU broadcast FMAs; doing this before the recurrence and storing to
    #  scratch keeps the 32-vreg intermediate off the serial chain's regalloc)
    traj = traj_ref[...]                                   # (S*B, 2) f32
    gx_scratch[...] = (traj[:, 0:1] * wx_ref[0:1, :]
                       + traj[:, 1:2] * wx_ref[1:2, :]
                       + bx_ref[...])                      # (S*B, 4H) f32

    def sig(x):
        # sigmoid(x) == 0.5*(1 + tanh(x/2)) exactly: 1 EUP push + 2 VPU ops.
        return 0.5 * (1.0 + jnp.tanh(0.5 * x))

    # --- t = 0: h = c = 0 -> gates = gates_x[0:B]; no matmul, no f-gate -----
    g0 = gx_scratch[0:B, :]
    i_g = sig(g0[:, 0 * H:1 * H])
    g_g = jnp.tanh(g0[:, 2 * H:3 * H])
    o_g = sig(g0[:, 3 * H:4 * H])
    c = i_g * g_g
    h = o_g * jnp.tanh(c)

    # --- t = 1 .. S-1: fully unrolled recurrence (S is static) --------------
    for t in range(1, S):
        gx_t = gx_scratch[t * B:(t + 1) * B, :]            # static, sublane-aligned slice
        gates = gx_t + jnp.dot(h.astype(jnp.bfloat16), whh_ref[...],
                               preferred_element_type=jnp.float32)   # (B, 4H)
        i_g = sig(gates[:, 0 * H:1 * H])
        f_g = sig(gates[:, 1 * H:2 * H])
        g_g = jnp.tanh(gates[:, 2 * H:3 * H])
        o_g = sig(gates[:, 3 * H:4 * H])
        c = f_g * c + i_g * g_g
        h = o_g * jnp.tanh(c)

    # --- classifier: Linear -> LeakyReLU(0.1) -> (Dropout: eval id) -> Linear -> Sigmoid
    w1_cp.wait()                                           # W1 now resident in VMEM
    z1 = jnp.dot(h.astype(jnp.bfloat16), w1_vmem[...],
                 preferred_element_type=jnp.float32) + b1_ref[...]   # (B, bottleneck)
    z1 = jnp.where(z1 > 0, z1, 0.1 * z1)
    # TODO(synk): Dropout(p=0.2) is identity in eval mode; training-mode RNG dropout not emitted.
    z2 = jnp.sum(z1 * w2_ref[...], axis=-1, keepdims=True) + b2_ref[...]  # VPU mul + lane reduce
    out_ref[...] = jax.nn.sigmoid(z2)


def prepare_params(params):
    """One-time weight prep (fold spatial embedding into the LSTM input projection,
    cast MXU operands to bf16, reshape W2 to a lane row). Exact algebra:
      gates_x = (x @ W_emb + b_emb) @ W_ih + b_lstm
              =  x @ (W_emb @ W_ih) + (b_emb @ W_ih + b_lstm)
    """
    hi = lax.Precision.HIGHEST
    wx = jnp.dot(params["w_emb"], params["w_ih"], precision=hi)                     # (2, 4H)
    bx = jnp.dot(params["b_emb"], params["w_ih"], precision=hi) + params["b_lstm"]  # (1, 4H)
    return {
        "wx": wx,
        "bx": bx,
        "w_hh": params["w_hh"].astype(jnp.bfloat16),      # bf16 MXU operand, f32 acc
        "w1": params["w1"].astype(jnp.bfloat16),
        "b1": params["b1"],
        "w2": params["w2"].reshape(1, -1),                # (1, bottleneck) row for VPU reduce
        "b2": params["b2"],
    }


def highway_discriminator_forward(traj, prep):
    """traj: (seq_len, batch, 2) float32. prep: output of prepare_params().
    Returns scores of shape (batch, 1)."""
    S, B, _ = traj.shape
    H = prep["w_hh"].shape[0]
    bneck = prep["w1"].shape[1]

    args = (traj.reshape(S * B, 2),          # time-major rows
            prep["wx"], prep["bx"], prep["w_hh"],
            prep["w1"],                      # stays in HBM; DMA'd inside the kernel
            prep["b1"], prep["w2"], prep["b2"])

    vmem = pl.BlockSpec(memory_space=pltpu.MemorySpace.VMEM)
    in_specs = [vmem, vmem, vmem, vmem,
                pl.BlockSpec(memory_space=pl.ANY),   # w1: manual async copy
                vmem, vmem, vmem]

    return pl.pallas_call(
        _disc_kernel,
        out_shape=jax.ShapeDtypeStruct((B, 1), jnp.float32),
        in_specs=in_specs,
        out_specs=vmem,
        scratch_shapes=[
            pltpu.VMEM((S * B, 4 * H), jnp.float32),     # gates_x staging
            pltpu.VMEM((H, bneck), jnp.bfloat16),        # W1 landing buffer
            pltpu.SemaphoreType.DMA(()),                 # W1 DMA semaphore
        ],
    )(*args)


def init_params(key, embedding_dim=256, h_dim=128, bottleneck_dim=1024):
    ks = jax.random.split(key, 10)

    def u(k, shape, bound):
        return jax.random.uniform(k, shape, jnp.float32, -bound, bound)

    k_emb = 1.0 / jnp.sqrt(2.0)
    k_lstm = 1.0 / jnp.sqrt(float(h_dim))
    k1 = 1.0 / jnp.sqrt(float(h_dim))
    k2 = 1.0 / jnp.sqrt(float(bottleneck_dim))
    return {
        # spatial_embedding: Linear(2, E)  (stored transposed: (2, E))
        "w_emb": u(ks[0], (2, embedding_dim), k_emb),
        "b_emb": u(ks[1], (1, embedding_dim), k_emb),
        # LSTM(E, H): W_ih (E, 4H), W_hh (H, 4H), combined bias (1, 4H), gate order (i,f,g,o)
        "w_ih": u(ks[2], (embedding_dim, 4 * h_dim), k_lstm),
        "w_hh": u(ks[3], (h_dim, 4 * h_dim), k_lstm),
        "b_lstm": u(ks[4], (1, 4 * h_dim), k_lstm) + u(ks[5], (1, 4 * h_dim), k_lstm),
        # classifier
        "w1": u(ks[6], (h_dim, bottleneck_dim), k1),
        "b1": u(ks[7], (1, bottleneck_dim), k1),
        "w2": u(ks[8], (bottleneck_dim, 1), k2),
        "b2": u(ks[9], (1, 1), k2),
    }


def reference_forward(traj, p):
    """Pure-JAX f32 reference following the original module formulation."""
    S, B, _ = traj.shape
    H = p["w_hh"].shape[0]
    emb = traj.reshape(-1, 2) @ p["w_emb"] + p["b_emb"]
    emb = emb.reshape(S, B, -1)

    def step(carry, x_t):
        h, c = carry
        gates = x_t @ p["w_ih"] + h @ p["w_hh"] + p["b_lstm"]
        i = jax.nn.sigmoid(gates[:, :H])
        f = jax.nn.sigmoid(gates[:, H:2 * H])
        g = jnp.tanh(gates[:, 2 * H:3 * H])
        o = jax.nn.sigmoid(gates[:, 3 * H:])
        c = f * c + i * g
        h = o * jnp.tanh(c)
        return (h, c), None

    (h, _), _ = lax.scan(step, (jnp.zeros((B, H)), jnp.zeros((B, H))), emb)
    z1 = h @ p["w1"] + p["b1"]
    z1 = jnp.where(z1 > 0, z1, 0.1 * z1)
    return jax.nn.sigmoid(z1 @ p["w2"] + p["b2"])


if __name__ == "__main__":
    # Small shapes consistent with the module: obs_len=3, pred_len=5 -> seq_len=8
    obs_len, pred_len, batch = 3, 5, 8
    seq_len = obs_len + pred_len
    embedding_dim, h_dim, bottleneck_dim = 256, 128, 1024

    key = jax.random.PRNGKey(0)
    k_traj, k_params = jax.random.split(key)
    traj = jax.random.normal(k_traj, (seq_len, batch, 2), jnp.float32)
    params = init_params(k_params, embedding_dim, h_dim, bottleneck_dim)

    # One-time weight prep (folds + bf16 casts), kept out of the forward path.
    prep = jax.tree_util.tree_map(jax.block_until_ready, prepare_params(params))

    fwd = jax.jit(highway_discriminator_forward)
    scores = fwd(traj, prep)
    scores = jax.block_until_ready(scores)
    assert scores.shape == (batch, 1)

    ref = reference_forward(traj, params)
    # bf16 MXU operands (f32 accumulation) => relaxed tolerance vs the f32 reference.
    assert jnp.allclose(scores, ref, rtol=3e-2, atol=3e-2), (scores, ref)

    print("KERNEL_OK")
</pallas_src>

<mosaic_0001>
module attributes {stable_mosaic.version = 11 : i64} {
  func.func @_disc_kernel(%arg0: memref<64x2xf32, #tpu.memory_space<vmem>>, %arg1: memref<2x512xf32, #tpu.memory_space<vmem>>, %arg2: memref<1x512xf32, #tpu.memory_space<vmem>>, %arg3: memref<128x512xbf16, #tpu.memory_space<vmem>>, %arg4: memref<128x1024xbf16, #tpu.memory_space<any>>, %arg5: memref<1x1024xf32, #tpu.memory_space<vmem>>, %arg6: memref<1x1024xf32, #tpu.memory_space<vmem>>, %arg7: memref<1x1xf32, #tpu.memory_space<vmem>>, %arg8: memref<8x1xf32, #tpu.memory_space<vmem>>, %arg9: memref<64x512xf32, #tpu.memory_space<vmem>>, %arg10: memref<128x1024xbf16, #tpu.memory_space<vmem>>, %arg11: memref<!tpu.dma_semaphore, #tpu.memory_space<semaphore_mem>>) attributes {dimension_semantics = [], scalar_prefetch = 0 : i64, scratch_operands = 3 : i64, tpu.core_type = #tpu.core_type<tc>} {
    tpu.enqueue_dma source(%arg4 : memref<128x1024xbf16, #tpu.memory_space<any>>) target(%arg10 : memref<128x1024xbf16, #tpu.memory_space<vmem>>) target_semaphore(%arg11 : memref<!tpu.dma_semaphore, #tpu.memory_space<semaphore_mem>>)
    %c0 = arith.constant 0 : index
    %c0_0 = arith.constant 0 : index
    %0 = vector.load %arg0[%c0, %c0_0] : memref<64x2xf32, #tpu.memory_space<vmem>>, vector<64x2xf32>
    %1 = vector.extract_strided_slice %0 {offsets = [0, 0], sizes = [64, 1], strides = [1, 1]} : vector<64x2xf32> to vector<64x1xf32>
    %c0_1 = arith.constant 0 : index
    %c0_2 = arith.constant 0 : index
    %2 = vector.load %arg1[%c0_1, %c0_2] : memref<2x512xf32, #tpu.memory_space<vmem>>, vector<1x512xf32>
    %3 = vector.broadcast %1 : vector<64x1xf32> to vector<64x512xf32>
    %4 = vector.broadcast %2 : vector<1x512xf32> to vector<64x512xf32>
    %5 = arith.mulf %3, %4 : vector<64x512xf32>
    %6 = vector.extract_strided_slice %0 {offsets = [0, 1], sizes = [64, 1], strides = [1, 1]} : vector<64x2xf32> to vector<64x1xf32>
    %c1 = arith.constant 1 : index
    %c0_3 = arith.constant 0 : index
    %7 = vector.load %arg1[%c1, %c0_3] : memref<2x512xf32, #tpu.memory_space<vmem>>, vector<1x512xf32>
    %8 = vector.broadcast %6 : vector<64x1xf32> to vector<64x512xf32>
    %9 = vector.broadcast %7 : vector<1x512xf32> to vector<64x512xf32>
    %10 = arith.mulf %8, %9 : vector<64x512xf32>
    %11 = arith.addf %5, %10 : vector<64x512xf32>
    %c0_4 = arith.constant 0 : index
    %c0_5 = arith.constant 0 : index
    %12 = vector.load %arg2[%c0_4, %c0_5] : memref<1x512xf32, #tpu.memory_space<vmem>>, vector<1x512xf32>
    %13 = vector.broadcast %12 : vector<1x512xf32> to vector<64x512xf32>
    %14 = arith.addf %11, %13 : vector<64x512xf32>
    %c0_6 = arith.constant 0 : index
    %c0_7 = arith.constant 0 : index
    %15 = vector.load %arg9[%c0_6, %c0_7] : memref<64x512xf32, #tpu.memory_space<vmem>>, vector<64x512xf32>
    tpu.vector_store %arg9[%c0_6, %c0_7], %14 {strides = array<i32>} : memref<64x512xf32, #tpu.memory_space<vmem>>, vector<64x512xf32>,
    %c0_8 = arith.constant 0 : index
    %c0_9 = arith.constant 0 : index
    %16 = vector.load %arg9[%c0_8, %c0_9] : memref<64x512xf32, #tpu.memory_space<vmem>>, vector<8x512xf32>
    %17 = vector.extract_strided_slice %16 {offsets = [0, 0], sizes = [8, 128], strides = [1, 1]} : vector<8x512xf32> to vector<8x128xf32>
    %cst = arith.constant 5.000000e-01 : f32
    %18 = vector.broadcast %cst : f32 to vector<8x128xf32>
    %19 = arith.mulf %18, %17 : vector<8x128xf32>
    %20 = math.tanh %19 : vector<8x128xf32>
    %cst_10 = arith.constant 1.000000e+00 : f32
    %21 = vector.broadcast %cst_10 : f32 to vector<8x128xf32>
    %22 = arith.addf %21, %20 : vector<8x128xf32>
    %cst_11 = arith.constant 5.000000e-01 : f32
    %23 = vector.broadcast %cst_11 : f32 to vector<8x128xf32>
    %24 = arith.mulf %23, %22 : vector<8x128xf32>
    %25 = vector.extract_strided_slice %16 {offsets = [0, 256], sizes = [8, 128], strides = [1, 1]} : vector<8x512xf32> to vector<8x128xf32>
    %26 = math.tanh %25 : vector<8x128xf32>
    %27 = vector.extract_strided_slice %16 {offsets = [0, 384], sizes = [8, 128], strides = [1, 1]} : vector<8x512xf32> to vector<8x128xf32>
    %cst_12 = arith.constant 5.000000e-01 : f32
    %28 = vector.broadcast %cst_12 : f32 to vector<8x128xf32>
    %29 = arith.mulf %28, %27 : vector<8x128xf32>
    %30 = math.tanh %29 : vector<8x128xf32>
    %cst_13 = arith.constant 1.000000e+00 : f32
    %31 = vector.broadcast %cst_13 : f32 to vector<8x128xf32>
    %32 = arith.addf %31, %30 : vector<8x128xf32>
    %cst_14 = arith.constant 5.000000e-01 : f32
    %33 = vector.broadcast %cst_14 : f32 to vector<8x128xf32>
    %34 = arith.mulf %33, %32 : vector<8x128xf32>
    %35 = arith.mulf %24, %26 : vector<8x128xf32>
    %36 = math.tanh %35 : vector<8x128xf32>
    %37 = arith.mulf %34, %36 : vector<8x128xf32>
    %c8 = arith.constant 8 : index
    %c0_15 = arith.constant 0 : index
    %38 = vector.load %arg9[%c8, %c0_15] : memref<64x512xf32, #tpu.memory_space<vmem>>, vector<8x512xf32>
    %39 = arith.truncf %37 : vector<8x128xf32> to vector<8x128xbf16>
    %c0_16 = arith.constant 0 : index
    %c0_17 = arith.constant 0 : index
    %40 = vector.load %arg3[%c0_16, %c0_17] : memref<128x512xbf16, #tpu.memory_space<vmem>>, vector<128x512xbf16>
    %cst_18 = arith.constant dense<0.000000e+00> : vector<8x512xf32>
    %41 = tpu.matmul %39, %40, %cst_18 {dimension_numbers = #tpu.dot_dimension_numbers<[1], [0], [0], [1], [0, 0, 1, 1], [], []>} : vector<8x128xbf16>, vector<128x512xbf16>, vector<8x512xf32> -> vector<8x512xf32>
    %42 = arith.addf %38, %41 : vector<8x512xf32>
    %43 = vector.extract_strided_slice %42 {offsets = [0, 0], sizes = [8, 128], strides = [1, 1]} : vector<8x512xf32> to vector<8x128xf32>
    %cst_19 = arith.constant 5.000000e-01 : f32
    %44 = vector.broadcast %cst_19 : f32 to vector<8x128xf32>
    %45 = arith.mulf %44, %43 : vector<8x128xf32>
    %46 = math.tanh %45 : vector<8x128xf32>
    %cst_20 = arith.constant 1.000000e+00 : f32
    %47 = vector.broadcast %cst_20 : f32 to vector<8x128xf32>
    %48 = arith.addf %47, %46 : vector<8x128xf32>
    %cst_21 = arith.constant 5.000000e-01 : f32
    %49 = vector.broadcast %cst_21 : f32 to vector<8x128xf32>
    %50 = arith.mulf %49, %48 : vector<8x128xf32>
    %51 = vector.extract_strided_slice %42 {offsets = [0, 128], sizes = [8, 128], strides = [1, 1]} : vector<8x512xf32> to vector<8x128xf32>
    %cst_22 = arith.constant 5.000000e-01 : f32
    %52 = vector.broadcast %cst_22 : f32 to vector<8x128xf32>
    %53 = arith.mulf %52, %51 : vector<8x128xf32>
    %54 = math.tanh %53 : vector<8x128xf32>
    %cst_23 = arith.constant 1.000000e+00 : f32
    %55 = vector.broadcast %cst_23 : f32 to vector<8x128xf32>
    %56 = arith.addf %55, %54 : vector<8x128xf32>
    %cst_24 = arith.constant 5.000000e-01 : f32
    %57 = vector.broadcast %cst_24 : f32 to vector<8x128xf32>
    %58 = arith.mulf %57, %56 : vector<8x128xf32>
    %59 = vector.extract_strided_slice %42 {offsets = [0, 256], sizes = [8, 128], strides = [1, 1]} : vector<8x512xf32> to vector<8x128xf32>
    %60 = math.tanh %59 : vector<8x128xf32>
    %61 = vector.extract_strided_slice %42 {offsets = [0, 384], sizes = [8, 128], strides = [1, 1]} : vector<8x512xf32> to vector<8x128xf32>
    %cst_25 = arith.constant 5.000000e-01 : f32
    %62 = vector.broadcast %cst_25 : f32 to vector<8x128xf32>
    %63 = arith.mulf %62, %61 : vector<8x128xf32>
    %64 = math.tanh %63 : vector<8x128xf32>
    %cst_26 = arith.constant 1.000000e+00 : f32
    %65 = vector.broadcast %cst_26 : f32 to vector<8x128xf32>
    %66 = arith.addf %65, %64 : vector<8x128xf32>
    %cst_27 = arith.constant 5.000000e-01 : f32
    %67 = vector.broadcast %cst_27 : f32 to vector<8x128xf32>
    %68 = arith.mulf %67, %66 : vector<8x128xf32>
    %69 = arith.mulf %58, %35 : vector<8x128xf32>
    %70 = arith.mulf %50, %60 : vector<8x128xf32>
    %71 = arith.addf %69, %70 : vector<8x128xf32>
    %72 = math.tanh %71 : vector<8x128xf32>
    %73 = arith.mulf %68, %72 : vector<8x128xf32>
    %c16 = arith.constant 16 : index
    %c0_28 = arith.constant 0 : index
    %74 = vector.load %arg9[%c16, %c0_28] : memref<64x512xf32, #tpu.memory_space<vmem>>, vector<8x512xf32>
    %75 = arith.truncf %73 : vector<8x128xf32> to vector<8x128xbf16>
    %c0_29 = arith.constant 0 : index
    %c0_30 = arith.constant 0 : index
    %76 = vector.load %arg3[%c0_29, %c0_30] : memref<128x512xbf16, #tpu.memory_space<vmem>>, vector<128x512xbf16>
    %cst_31 = arith.constant dense<0.000000e+00> : vector<8x512xf32>
    %77 = tpu.matmul %75, %76, %cst_31 {dimension_numbers = #tpu.dot_dimension_numbers<[1], [0], [0], [1], [0, 0, 1, 1], [], []>} : vector<8x128xbf16>, vector<128x512xbf16>, vector<8x512xf32> -> vector<8x512xf32>
    %78 = arith.addf %74, %77 : vector<8x512xf32>
    %79 = vector.extract_strided_slice %78 {offsets = [0, 0], sizes = [8, 128], strides = [1, 1]} : vector<8x512xf32> to vector<8x128xf32>
    %cst_32 = arith.constant 5.000000e-01 : f32
    %80 = vector.broadcast %cst_32 : f32 to vector<8x128xf32>
    %81 = arith.mulf %80, %79 : vector<8x128xf32>
    %82 = math.tanh %81 : vector<8x128xf32>
    %cst_33 = arith.constant 1.000000e+00 : f32
    %83 = vector.broadcast %cst_33 : f32 to vector<8x128xf32>
    %84 = arith.addf %83, %82 : vector<8x128xf32>
    %cst_34 = arith.constant 5.000000e-01 : f32
    %85 = vector.broadcast %cst_34 : f32 to vector<8x128xf32>
    %86 = arith.mulf %85, %84 : vector<8x128xf32>
    %87 = vector.extract_strided_slice %78 {offsets = [0, 128], sizes = [8, 128], strides = [1, 1]} : vector<8x512xf32> to vector<8x128xf32>
    %cst_35 = arith.constant 5.000000e-01 : f32
    %88 = vector.broadcast %cst_35 : f32 to vector<8x128xf32>
    %89 = arith.mulf %88, %87 : vector<8x128xf32>
    %90 = math.tanh %89 : vector<8x128xf32>
    %cst_36 = arith.constant 1.000000e+00 : f32
    %91 = vector.broadcast %cst_36 : f32 to vector<8x128xf32>
    %92 = arith.addf %91, %90 : vector<8x128xf32>
    %cst_37 = arith.constant 5.000000e-01 : f32
    %93 = vector.broadcast %cst_37 : f32 to vector<8x128xf32>
    %94 = arith.mulf %93, %92 : vector<8x128xf32>
    %95 = vector.extract_strided_slice %78 {offsets = [0, 256], sizes = [8, 128], strides = [1, 1]} : vector<8x512xf32> to vector<8x128xf32>
    %96 = math.tanh %95 : vector<8x128xf32>
    %97 = vector.extract_strided_slice %78 {offsets = [0, 384], sizes = [8, 128], strides = [1, 1]} : vector<8x512xf32> to vector<8x128xf32>
    %cst_38 = arith.constant 5.000000e-01 : f32
    %98 = vector.broadcast %cst_38 : f32 to vector<8x128xf32>
    %99 = arith.mulf %98, %97 : vector<8x128xf32>
    %100 = math.tanh %99 : vector<8x128xf32>
    %cst_39 = arith.constant 1.000000e+00 : f32
    %101 = vector.broadcast %cst_39 : f32 to vector<8x128xf32>
    %102 = arith.addf %101, %100 : vector<8x128xf32>
    %cst_40 = arith.constant 5.000000e-01 : f32
    %103 = vector.broadcast %cst_40 : f32 to vector<8x128xf32>
    %104 = arith.mulf %103, %102 : vector<8x128xf32>
    %105 = arith.mulf %94, %71 : vector<8x128xf32>
    %106 = arith.mulf %86, %96 : vector<8x128xf32>
    %107 = arith.addf %105, %106 : vector<8x128xf32>
    %108 = math.tanh %107 : vector<8x128xf32>
    %109 = arith.mulf %104, %108 : vector<8x128xf32>
    %c24 = arith.constant 24 : index
    %c0_41 = arith.constant 0 : index
    %110 = vector.load %arg9[%c24, %c0_41] : memref<64x512xf32, #tpu.memory_space<vmem>>, vector<8x512xf32>
    %111 = arith.truncf %109 : vector<8x128xf32> to vector<8x128xbf16>
    %c0_42 = arith.constant 0 : index
    %c0_43 = arith.constant 0 : index
    %112 = vector.load %arg3[%c0_42, %c0_43] : memref<128x512xbf16, #tpu.memory_space<vmem>>, vector<128x512xbf16>
    %cst_44 = arith.constant dense<0.000000e+00> : vector<8x512xf32>
    %113 = tpu.matmul %111, %112, %cst_44 {dimension_numbers = #tpu.dot_dimension_numbers<[1], [0], [0], [1], [0, 0, 1, 1], [], []>} : vector<8x128xbf16>, vector<128x512xbf16>, vector<8x512xf32> -> vector<8x512xf32>
    %114 = arith.addf %110, %113 : vector<8x512xf32>
    %115 = vector.extract_strided_slice %114 {offsets = [0, 0], sizes = [8, 128], strides = [1, 1]} : vector<8x512xf32> to vector<8x128xf32>
    %cst_45 = arith.constant 5.000000e-01 : f32
    %116 = vector.broadcast %cst_45 : f32 to vector<8x128xf32>
    %117 = arith.mulf %116, %115 : vector<8x128xf32>
    %118 = math.tanh %117 : vector<8x128xf32>
    %cst_46 = arith.constant 1.000000e+00 : f32
    %119 = vector.broadcast %cst_46 : f32 to vector<8x128xf32>
    %120 = arith.addf %119, %118 : vector<8x128xf32>
    %cst_47 = arith.constant 5.000000e-01 : f32
    %121 = vector.broadcast %cst_47 : f32 to vector<8x128xf32>
    %122 = arith.mulf %121, %120 : vector<8x128xf32>
    %123 = vector.extract_strided_slice %114 {offsets = [0, 128], sizes = [8, 128], strides = [1, 1]} : vector<8x512xf32> to vector<8x128xf32>
    %cst_48 = arith.constant 5.000000e-01 : f32
    %124 = vector.broadcast %cst_48 : f32 to vector<8x128xf32>
    %125 = arith.mulf %124, %123 : vector<8x128xf32>
    %126 = math.tanh %125 : vector<8x128xf32>
    %cst_49 = arith.constant 1.000000e+00 : f32
    %127 = vector.broadcast %cst_49 : f32 to vector<8x128xf32>
    %128 = arith.addf %127, %126 : vector<8x128xf32>
    %cst_50 = arith.constant 5.000000e-01 : f32
    %129 = vector.broadcast %cst_50 : f32 to vector<8x128xf32>
    %130 = arith.mulf %129, %128 : vector<8x128xf32>
    %131 = vector.extract_strided_slice %114 {offsets = [0, 256], sizes = [8, 128], strides = [1, 1]} : vector<8x512xf32> to vector<8x128xf32>
    %132 = math.tanh %131 : vector<8x128xf32>
    %133 = vector.extract_strided_slice %114 {offsets = [0, 384], sizes = [8, 128], strides = [1, 1]} : vector<8x512xf32> to vector<8x128xf32>
    %cst_51 = arith.constant 5.000000e-01 : f32
    %134 = vector.broadcast %cst_51 : f32 to vector<8x128xf32>
    %135 = arith.mulf %134, %133 : vector<8x128xf32>
    %136 = math.tanh %135 : vector<8x128xf32>
    %cst_52 = arith.constant 1.000000e+00 : f32
    %137 = vector.broadcast %cst_52 : f32 to vector<8x128xf32>
    %138 = arith.addf %137, %136 : vector<8x128xf32>
    %cst_53 = arith.constant 5.000000e-01 : f32
    %139 = vector.broadcast %cst_53 : f32 to vector<8x128xf32>
    %140 = arith.mulf %139, %138 : vector<8x128xf32>
    %141 = arith.mulf %130, %107 : vector<8x128xf32>
    %142 = arith.mulf %122, %132 : vector<8x128xf32>
    %143 = arith.addf %141, %142 : vector<8x128xf32>
    %144 = math.tanh %143 : vector<8x128xf32>
    %145 = arith.mulf %140, %144 : vector<8x128xf32>
    %c32 = arith.constant 32 : index
    %c0_54 = arith.constant 0 : index
    %146 = vector.load %arg9[%c32, %c0_54] : memref<64x512xf32, #tpu.memory_space<vmem>>, vector<8x512xf32>
    %147 = arith.truncf %145 : vector<8x128xf32> to vector<8x128xbf16>
    %c0_55 = arith.constant 0 : index
    %c0_56 = arith.constant 0 : index
    %148 = vector.load %arg3[%c0_55, %c0_56] : memref<128x512xbf16, #tpu.memory_space<vmem>>, vector<128x512xbf16>
    %cst_57 = arith.constant dense<0.000000e+00> : vector<8x512xf32>
    %149 = tpu.matmul %147, %148, %cst_57 {dimension_numbers = #tpu.dot_dimension_numbers<[1], [0], [0], [1], [0, 0, 1, 1], [], []>} : vector<8x128xbf16>, vector<128x512xbf16>, vector<8x512xf32> -> vector<8x512xf32>
    %150 = arith.addf %146, %149 : vector<8x512xf32>
    %151 = vector.extract_strided_slice %150 {offsets = [0, 0], sizes = [8, 128], strides = [1, 1]} : vector<8x512xf32> to vector<8x128xf32>
    %cst_58 = arith.constant 5.000000e-01 : f32
    %152 = vector.broadcast %cst_58 : f32 to vector<8x128xf32>
    %153 = arith.mulf %152, %151 : vector<8x128xf32>
    %154 = math.tanh %153 : vector<8x128xf32>
    %cst_59 = arith.constant 1.000000e+00 : f32
    %155 = vector.broadcast %cst_59 : f32 to vector<8x128xf32>
    %156 = arith.addf %155, %154 : vector<8x128xf32>
    %cst_60 = arith.constant 5.000000e-01 : f32
    %157 = vector.broadcast %cst_60 : f32 to vector<8x128xf32>
    %158 = arith.mulf %157, %156 : vector<8x128xf32>
    %159 = vector.extract_strided_slice %150 {offsets = [0, 128], sizes = [8, 128], strides = [1, 1]} : vector<8x512xf32> to vector<8x128xf32>
    %cst_61 = arith.constant 5.000000e-01 : f32
    %160 = vector.broadcast %cst_61 : f32 to vector<8x128xf32>
    %161 = arith.mulf %160, %159 : vector<8x128xf32>
    %162 = math.tanh %161 : vector<8x128xf32>
    %cst_62 = arith.constant 1.000000e+00 : f32
    %163 = vector.broadcast %cst_62 : f32 to vector<8x128xf32>
    %164 = arith.addf %163, %162 : vector<8x128xf32>
    %cst_63 = arith.constant 5.000000e-01 : f32
    %165 = vector.broadcast %cst_63 : f32 to vector<8x128xf32>
    %166 = arith.mulf %165, %164 : vector<8x128xf32>
    %167 = vector.extract_strided_slice %150 {offsets = [0, 256], sizes = [8, 128], strides = [1, 1]} : vector<8x512xf32> to vector<8x128xf32>
    %168 = math.tanh %167 : vector<8x128xf32>
    %169 = vector.extract_strided_slice %150 {offsets = [0, 384], sizes = [8, 128], strides = [1, 1]} : vector<8x512xf32> to vector<8x128xf32>
    %cst_64 = arith.constant 5.000000e-01 : f32
    %170 = vector.broadcast %cst_64 : f32 to vector<8x128xf32>
    %171 = arith.mulf %170, %169 : vector<8x128xf32>
    %172 = math.tanh %171 : vector<8x128xf32>
    %cst_65 = arith.constant 1.000000e+00 : f32
    %173 = vector.broadcast %cst_65 : f32 to vector<8x128xf32>
    %174 = arith.addf %173, %172 : vector<8x128xf32>
    %cst_66 = arith.constant 5.000000e-01 : f32
    %175 = vector.broadcast %cst_66 : f32 to vector<8x128xf32>
    %176 = arith.mulf %175, %174 : vector<8x128xf32>
    %177 = arith.mulf %166, %143 : vector<8x128xf32>
    %178 = arith.mulf %158, %168 : vector<8x128xf32>
    %179 = arith.addf %177, %178 : vector<8x128xf32>
    %180 = math.tanh %179 : vector<8x128xf32>
    %181 = arith.mulf %176, %180 : vector<8x128xf32>
    %c40 = arith.constant 40 : index
    %c0_67 = arith.constant 0 : index
    %182 = vector.load %arg9[%c40, %c0_67] : memref<64x512xf32, #tpu.memory_space<vmem>>, vector<8x512xf32>
    %183 = arith.truncf %181 : vector<8x128xf32> to vector<8x128xbf16>
    %c0_68 = arith.constant 0 : index
    %c0_69 = arith.constant 0 : index
    %184 = vector.load %arg3[%c0_68, %c0_69] : memref<128x512xbf16, #tpu.memory_space<vmem>>, vector<128x512xbf16>
    %cst_70 = arith.constant dense<0.000000e+00> : vector<8x512xf32>
    %185 = tpu.matmul %183, %184, %cst_70 {dimension_numbers = #tpu.dot_dimension_numbers<[1], [0], [0], [1], [0, 0, 1, 1], [], []>} : vector<8x128xbf16>, vector<128x512xbf16>, vector<8x512xf32> -> vector<8x512xf32>
    %186 = arith.addf %182, %185 : vector<8x512xf32>
    %187 = vector.extract_strided_slice %186 {offsets = [0, 0], sizes = [8, 128], strides = [1, 1]} : vector<8x512xf32> to vector<8x128xf32>
    %cst_71 = arith.constant 5.000000e-01 : f32
    %188 = vector.broadcast %cst_71 : f32 to vector<8x128xf32>
    %189 = arith.mulf %188, %187 : vector<8x128xf32>
    %190 = math.tanh %189 : vector<8x128xf32>
    %cst_72 = arith.constant 1.000000e+00 : f32
    %191 = vector.broadcast %cst_72 : f32 to vector<8x128xf32>
    %192 = arith.addf %191, %190 : vector<8x128xf32>
    %cst_73 = arith.constant 5.000000e-01 : f32
    %193 = vector.broadcast %cst_73 : f32 to vector<8x128xf32>
    %194 = arith.mulf %193, %192 : vector<8x128xf32>
    %195 = vector.extract_strided_slice %186 {offsets = [0, 128], sizes = [8, 128], strides = [1, 1]} : vector<8x512xf32> to vector<8x128xf32>
    %cst_74 = arith.constant 5.000000e-01 : f32
    %196 = vector.broadcast %cst_74 : f32 to vector<8x128xf32>
    %197 = arith.mulf %196, %195 : vector<8x128xf32>
    %198 = math.tanh %197 : vector<8x128xf32>
    %cst_75 = arith.constant 1.000000e+00 : f32
    %199 = vector.broadcast %cst_75 : f32 to vector<8x128xf32>
    %200 = arith.addf %199, %198 : vector<8x128xf32>
    %cst_76 = arith.constant 5.000000e-01 : f32
    %201 = vector.broadcast %cst_76 : f32 to vector<8x128xf32>
    %202 = arith.mulf %201, %200 : vector<8x128xf32>
    %203 = vector.extract_strided_slice %186 {offsets = [0, 256], sizes = [8, 128], strides = [1, 1]} : vector<8x512xf32> to vector<8x128xf32>
    %204 = math.tanh %203 : vector<8x128xf32>
    %205 = vector.extract_strided_slice %186 {offsets = [0, 384], sizes = [8, 128], strides = [1, 1]} : vector<8x512xf32> to vector<8x128xf32>
    %cst_77 = arith.constant 5.000000e-01 : f32
    %206 = vector.broadcast %cst_77 : f32 to vector<8x128xf32>
    %207 = arith.mulf %206, %205 : vector<8x128xf32>
    %208 = math.tanh %207 : vector<8x128xf32>
    %cst_78 = arith.constant 1.000000e+00 : f32
    %209 = vector.broadcast %cst_78 : f32 to vector<8x128xf32>
    %210 = arith.addf %209, %208 : vector<8x128xf32>
    %cst_79 = arith.constant 5.000000e-01 : f32
    %211 = vector.broadcast %cst_79 : f32 to vector<8x128xf32>
    %212 = arith.mulf %211, %210 : vector<8x128xf32>
    %213 = arith.mulf %202, %179 : vector<8x128xf32>
    %214 = arith.mulf %194, %204 : vector<8x128xf32>
    %215 = arith.addf %213, %214 : vector<8x128xf32>
    %216 = math.tanh %215 : vector<8x128xf32>
    %217 = arith.mulf %212, %216 : vector<8x128xf32>
    %c48 = arith.constant 48 : index
    %c0_80 = arith.constant 0 : index
    %218 = vector.load %arg9[%c48, %c0_80] : memref<64x512xf32, #tpu.memory_space<vmem>>, vector<8x512xf32>
    %219 = arith.truncf %217 : vector<8x128xf32> to vector<8x128xbf16>
    %c0_81 = arith.constant 0 : index
    %c0_82 = arith.constant 0 : index
    %220 = vector.load %arg3[%c0_81, %c0_82] : memref<128x512xbf16, #tpu.memory_space<vmem>>, vector<128x512xbf16>
    %cst_83 = arith.constant dense<0.000000e+00> : vector<8x512xf32>
    %221 = tpu.matmul %219, %220, %cst_83 {dimension_numbers = #tpu.dot_dimension_numbers<[1], [0], [0], [1], [0, 0, 1, 1], [], []>} : vector<8x128xbf16>, vector<128x512xbf16>, vector<8x512xf32> -> vector<8x512xf32>
    %222 = arith.addf %218, %221 : vector<8x512xf32>
    %223 = vector.extract_strided_slice %222 {offsets = [0, 0], sizes = [8, 128], strides = [1, 1]} : vector<8x512xf32> to vector<8x128xf32>
    %cst_84 = arith.constant 5.000000e-01 : f32
    %224 = vector.broadcast %cst_84 : f32 to vector<8x128xf32>
    %225 = arith.mulf %224, %223 : vector<8x128xf32>
    %226 = math.tanh %225 : vector<8x128xf32>
    %cst_85 = arith.constant 1.000000e+00 : f32
    %227 = vector.broadcast %cst_85 : f32 to vector<8x128xf32>
    %228 = arith.addf %227, %226 : vector<8x128xf32>
    %cst_86 = arith.constant 5.000000e-01 : f32
    %229 = vector.broadcast %cst_86 : f32 to vector<8x128xf32>
    %230 = arith.mulf %229, %228 : vector<8x128xf32>
    %231 = vector.extract_strided_slice %222 {offsets = [0, 128], sizes = [8, 128], strides = [1, 1]} : vector<8x512xf32> to vector<8x128xf32>
    %cst_87 = arith.constant 5.000000e-01 : f32
    %232 = vector.broadcast %cst_87 : f32 to vector<8x128xf32>
    %233 = arith.mulf %232, %231 : vector<8x128xf32>
    %234 = math.tanh %233 : vector<8x128xf32>
    %cst_88 = arith.constant 1.000000e+00 : f32
    %235 = vector.broadcast %cst_88 : f32 to vector<8x128xf32>
    %236 = arith.addf %235, %234 : vector<8x128xf32>
    %cst_89 = arith.constant 5.000000e-01 : f32
    %237 = vector.broadcast %cst_89 : f32 to vector<8x128xf32>
    %238 = arith.mulf %237, %236 : vector<8x128xf32>
    %239 = vector.extract_strided_slice %222 {offsets = [0, 256], sizes = [8, 128], strides = [1, 1]} : vector<8x512xf32> to vector<8x128xf32>
    %240 = math.tanh %239 : vector<8x128xf32>
    %241 = vector.extract_strided_slice %222 {offsets = [0, 384], sizes = [8, 128], strides = [1, 1]} : vector<8x512xf32> to vector<8x128xf32>
    %cst_90 = arith.constant 5.000000e-01 : f32
    %242 = vector.broadcast %cst_90 : f32 to vector<8x128xf32>
    %243 = arith.mulf %242, %241 : vector<8x128xf32>
    %244 = math.tanh %243 : vector<8x128xf32>
    %cst_91 = arith.constant 1.000000e+00 : f32
    %245 = vector.broadcast %cst_91 : f32 to vector<8x128xf32>
    %246 = arith.addf %245, %244 : vector<8x128xf32>
    %cst_92 = arith.constant 5.000000e-01 : f32
    %247 = vector.broadcast %cst_92 : f32 to vector<8x128xf32>
    %248 = arith.mulf %247, %246 : vector<8x128xf32>
    %249 = arith.mulf %238, %215 : vector<8x128xf32>
    %250 = arith.mulf %230, %240 : vector<8x128xf32>
    %251 = arith.addf %249, %250 : vector<8x128xf32>
    %252 = math.tanh %251 : vector<8x128xf32>
    %253 = arith.mulf %248, %252 : vector<8x128xf32>
    %c56 = arith.constant 56 : index
    %c0_93 = arith.constant 0 : index
    %254 = vector.load %arg9[%c56, %c0_93] : memref<64x512xf32, #tpu.memory_space<vmem>>, vector<8x512xf32>
    %255 = arith.truncf %253 : vector<8x128xf32> to vector<8x128xbf16>
    %c0_94 = arith.constant 0 : index
    %c0_95 = arith.constant 0 : index
    %256 = vector.load %arg3[%c0_94, %c0_95] : memref<128x512xbf16, #tpu.memory_space<vmem>>, vector<128x512xbf16>
    %cst_96 = arith.constant dense<0.000000e+00> : vector<8x512xf32>
    %257 = tpu.matmul %255, %256, %cst_96 {dimension_numbers = #tpu.dot_dimension_numbers<[1], [0], [0], [1], [0, 0, 1, 1], [], []>} : vector<8x128xbf16>, vector<128x512xbf16>, vector<8x512xf32> -> vector<8x512xf32>
    %258 = arith.addf %254, %257 : vector<8x512xf32>
    %259 = vector.extract_strided_slice %258 {offsets = [0, 0], sizes = [8, 128], strides = [1, 1]} : vector<8x512xf32> to vector<8x128xf32>
    %cst_97 = arith.constant 5.000000e-01 : f32
    %260 = vector.broadcast %cst_97 : f32 to vector<8x128xf32>
    %261 = arith.mulf %260, %259 : vector<8x128xf32>
    %262 = math.tanh %261 : vector<8x128xf32>
    %cst_98 = arith.constant 1.000000e+00 : f32
    %263 = vector.broadcast %cst_98 : f32 to vector<8x128xf32>
    %264 = arith.addf %263, %262 : vector<8x128xf32>
    %cst_99 = arith.constant 5.000000e-01 : f32
    %265 = vector.broadcast %cst_99 : f32 to vector<8x128xf32>
    %266 = arith.mulf %265, %264 : vector<8x128xf32>
    %267 = vector.extract_strided_slice %258 {offsets = [0, 128], sizes = [8, 128], strides = [1, 1]} : vector<8x512xf32> to vector<8x128xf32>
    %cst_100 = arith.constant 5.000000e-01 : f32
    %268 = vector.broadcast %cst_100 : f32 to vector<8x128xf32>
    %269 = arith.mulf %268, %267 : vector<8x128xf32>
    %270 = math.tanh %269 : vector<8x128xf32>
    %cst_101 = arith.constant 1.000000e+00 : f32
    %271 = vector.broadcast %cst_101 : f32 to vector<8x128xf32>
    %272 = arith.addf %271, %270 : vector<8x128xf32>
    %cst_102 = arith.constant 5.000000e-01 : f32
    %273 = vector.broadcast %cst_102 : f32 to vector<8x128xf32>
    %274 = arith.mulf %273, %272 : vector<8x128xf32>
    %275 = vector.extract_strided_slice %258 {offsets = [0, 256], sizes = [8, 128], strides = [1, 1]} : vector<8x512xf32> to vector<8x128xf32>
    %276 = math.tanh %275 : vector<8x128xf32>
    %277 = vector.extract_strided_slice %258 {offsets = [0, 384], sizes = [8, 128], strides = [1, 1]} : vector<8x512xf32> to vector<8x128xf32>
    %cst_103 = arith.constant 5.000000e-01 : f32
    %278 = vector.broadcast %cst_103 : f32 to vector<8x128xf32>
    %279 = arith.mulf %278, %277 : vector<8x128xf32>
    %280 = math.tanh %279 : vector<8x128xf32>
    %cst_104 = arith.constant 1.000000e+00 : f32
    %281 = vector.broadcast %cst_104 : f32 to vector<8x128xf32>
    %282 = arith.addf %281, %280 : vector<8x128xf32>
    %cst_105 = arith.constant 5.000000e-01 : f32
    %283 = vector.broadcast %cst_105 : f32 to vector<8x128xf32>
    %284 = arith.mulf %283, %282 : vector<8x128xf32>
    %285 = arith.mulf %274, %251 : vector<8x128xf32>
    %286 = arith.mulf %266, %276 : vector<8x128xf32>
    %287 = arith.addf %285, %286 : vector<8x128xf32>
    %288 = math.tanh %287 : vector<8x128xf32>
    %289 = arith.mulf %284, %288 : vector<8x128xf32>
    tpu.wait_dma2 semaphore(%arg11 : memref<!tpu.dma_semaphore, #tpu.memory_space<semaphore_mem>>) src(%arg4 : memref<128x1024xbf16, #tpu.memory_space<any>>) dst(%arg10 : memref<128x1024xbf16, #tpu.memory_space<vmem>>)
    %290 = arith.truncf %289 : vector<8x128xf32> to vector<8x128xbf16>
    %c0_106 = arith.constant 0 : index
    %c0_107 = arith.constant 0 : index
    %291 = vector.load %arg10[%c0_106, %c0_107] : memref<128x1024xbf16, #tpu.memory_space<vmem>>, vector<128x1024xbf16>
    %cst_108 = arith.constant dense<0.000000e+00> : vector<8x1024xf32>
    %292 = tpu.matmul %290, %291, %cst_108 {dimension_numbers = #tpu.dot_dimension_numbers<[1], [0], [0], [1], [0, 0, 1, 1], [], []>} : vector<8x128xbf16>, vector<128x1024xbf16>, vector<8x1024xf32> -> vector<8x1024xf32>
    %c0_109 = arith.constant 0 : index
    %c0_110 = arith.constant 0 : index
    %293 = vector.load %arg5[%c0_109, %c0_110] : memref<1x1024xf32, #tpu.memory_space<vmem>>, vector<1x1024xf32>
    %294 = vector.broadcast %293 : vector<1x1024xf32> to vector<8x1024xf32>
    %295 = arith.addf %292, %294 : vector<8x1024xf32>
    %cst_111 = arith.constant 0.000000e+00 : f32
    %296 = vector.broadcast %cst_111 : f32 to vector<8x1024xf32>
    %297 = arith.cmpf ogt, %295, %296 : vector<8x1024xf32>
    %cst_112 = arith.constant 1.000000e-01 : f32
    %298 = vector.broadcast %cst_112 : f32 to vector<8x1024xf32>
    %299 = arith.mulf %298, %295 : vector<8x1024xf32>
    %300 = arith.select %297, %295, %299 : vector<8x1024xi1>, vector<8x1024xf32>
    %c0_113 = arith.constant 0 : index
    %c0_114 = arith.constant 0 : index
    %301 = vector.load %arg6[%c0_113, %c0_114] : memref<1x1024xf32, #tpu.memory_space<vmem>>, vector<1x1024xf32>
    %302 = vector.broadcast %301 : vector<1x1024xf32> to vector<8x1024xf32>
    %303 = arith.mulf %300, %302 : vector<8x1024xf32>
    %cst_115 = arith.constant dense<0.000000e+00> : vector<8xf32>
    %304 = vector.multi_reduction <add>, %303, %cst_115 [1] : vector<8x1024xf32> to vector<8xf32>
    %305 = vector.shape_cast %304 : vector<8xf32> to vector<8x1xf32>
    %c0_116 = arith.constant 0 : index
    %c0_117 = arith.constant 0 : index
    %306 = vector.load %arg7[%c0_116, %c0_117] : memref<1x1xf32, #tpu.memory_space<vmem>>, vector<1x1xf32>
    %307 = vector.broadcast %306 : vector<1x1xf32> to vector<8x1xf32>
    %308 = arith.addf %305, %307 : vector<8x1xf32>
    %309 = arith.negf %308 : vector<8x1xf32>
    %310 = math.exp %309 : vector<8x1xf32>
    %cst_118 = arith.constant 1.000000e+00 : f32
    %311 = vector.broadcast %cst_118 : f32 to vector<8x1xf32>
    %312 = arith.addf %311, %310 : vector<8x1xf32>
    %313 = arith.divf %311, %312 : vector<8x1xf32>
    %c0_119 = arith.constant 0 : index
    %c0_120 = arith.constant 0 : index
    %314 = vector.load %arg8[%c0_119, %c0_120] : memref<8x1xf32, #tpu.memory_space<vmem>>, vector<8x1xf32>
    tpu.vector_store %arg8[%c0_119, %c0_120], %313 {strides = array<i32>} : memref<8x1xf32, #tpu.memory_space<vmem>>, vector<8x1xf32>,
    return
  }
}

</mosaic_0001>

<llo_original>
// kernel: highway_discriminator_forward.1
$region0: #{highway_discriminator_forward.1}
  #allocation0 [shape = 'u32[]', space=smem, size = 0x4, offset = 0x4, fixed_abs, tag = 'smem constant byte address 0x4 - core index']
  #allocation1 [shape = 'u32[144,128]{1,0:T(1,128)}', space=vmem, size = 0x12000, scoped, tag = 'internal scratch']
  #allocation2 [shape = 'f32[64,512]{1,0:T(8,128)}', space=vmem, size = 0x20000, scoped, tag = 'scratch operand']
  #allocation3 [shape = 'bf16[128,1024]{1,0:T(16,128)(2,1)}', space=vmem, size = 0x40000, scoped, tag = 'scratch operand']
  #allocation4 [shape = 's32[1]{0}', space=sflag, size = 0x4, scoped, tag = 'scratch operand']
  #allocation5 [shape = 'f32[1,1]{1,0:T(1,128)S(1)}', space=vmem, size = 0x200, scoped, tag = 'scoped memory for highway_discriminator_forward.1']
  #allocation8 [shape = 's32[]', space=sflag, size = 0x4, offset = 0, fixed_abs, tag = 'sflag constant byte address 0x0 - dummy sync flag']
  %s0 = inlined_call_operand.vmem [shape: f32[64,2], index: 0, kind: input, shape index: {}]
  %s1 = inlined_call_operand.vmem [shape: f32[2,512], index: 1, kind: input, shape index: {}]
  %s2 = inlined_call_operand.vmem [shape: f32[1,512], index: 2, kind: input, shape index: {}]
  %s3 = inlined_call_operand.hbm [shape: bf16[128,512], index: 3, kind: input, shape index: {}]
  %s4 = inlined_call_operand.hbm [shape: bf16[128,1024], index: 4, kind: input, shape index: {}]
  %s5 = inlined_call_operand.vmem [shape: f32[1,1024], index: 5, kind: input, shape index: {}]
  %s6 = inlined_call_operand.vmem [shape: f32[1,1024], index: 6, kind: input, shape index: {}]
  %s7 = inlined_call_operand.<no memory space> [shape: f32[1,1], index: 7, kind: input, shape index: {}]
  %s8 = inlined_call_operand.vmem [shape: f32[8,1], index: 8, kind: output, shape index: {}]
  %s9 = sld [smem:[#allocation0]]
  $region42: #{highway_discriminator_forward.1} parent=0
    _
  %s11 = ssub.s32 1, %s9
  %s12 = scalar_select 0, %s11, %s9
  %v13 = vstv %s7
  %14 = vst [vmem:[#allocation5] sm:$0x1] %v13
  $region1: #{highway_discriminator_forward.1} parent=0
    #allocation6 [shape = 'u8[131072]{0}', space=vmem, size = 0x20000, scoped, tag = 'input window, operand 3, single buffered']
    #allocation7 [shape = 's32[1]{0}', space=sflag, size = 0x4, scoped, tag = 'scoped memory for highway_discriminator_forward.1']
    #allocation9 [shape = 'u32[9]{0}', space=smem, size = 0x24, scoped, tag = 'DMA stride descriptor']
    %15 = vsyncpa [#allocation7], 0
    // Predicated region
    $region2: #{highway_discriminator_forward.1} parent=1 // pred_check
      _
    $region3: #{highway_discriminator_forward.1} parent=1 // pred_check_branch
      %17 = sbr.rel (0) target = $region5
    $region4: #{highway_discriminator_forward.1} parent=1 // pred_region
      _
    $region5: #{highway_discriminator_forward.1} parent=1 // pred_fallthru
      _
    // Predicated region
    $region6: #{highway_discriminator_forward.1} parent=1 // pred_check
      _
    $region7: #{highway_discriminator_forward.1} parent=1 // pred_check_branch
      %19 = sbr.rel (0) target = $region9
    $region8: #{highway_discriminator_forward.1} parent=1 // pred_region
      _
    $region9: #{highway_discriminator_forward.1} parent=1 // pred_fallthru
      _
    // Predicated region
    $region10: #{highway_discriminator_forward.1} parent=1 // pred_check
      _
    $region11: #{highway_discriminator_forward.1} parent=1 // pred_check_branch
      %21 = sbr.rel (0) target = $region13
    $region12: #{highway_discriminator_forward.1} parent=1 // pred_region
      _
    $region13: #{highway_discriminator_forward.1} parent=1 // pred_fallthru
      _
    // Predicated region
    $region14: #{highway_discriminator_forward.1} parent=1 // pred_check
      _
    $region15: #{highway_discriminator_forward.1} parent=1 // pred_check_branch
      %23 = sbr.rel (0) target = $region17
    $region16: #{highway_discriminator_forward.1} parent=1 // pred_region
      %s25 = ssub.s32 4096, 4096
      %26 = vsyncadd [#allocation7], %s25
      %s27 = sshll.u32 [#allocation6], 4
      %s28 = int_to_ptr.vmem [resolvable:$true] %s27
      %33 = dma.hbm_to_vmem [thread:$0]  %s3, 4096, %s28, [#allocation7], 256, 256, 16
    $region17: #{highway_discriminator_forward.1} parent=1 // pred_fallthru
      _
    // Predicated region
    $region18: #{highway_discriminator_forward.1} parent=1 // pred_check
      _
    $region19: #{highway_discriminator_forward.1} parent=1 // pred_check_branch
      %35 = sbr.rel (0) target = $region21
    $region20: #{highway_discriminator_forward.1} parent=1 // pred_region
      _
    $region21: #{highway_discriminator_forward.1} parent=1 // pred_fallthru
      _
    // Predicated region
    $region22: #{highway_discriminator_forward.1} parent=1 // pred_check
      _
    $region23: #{highway_discriminator_forward.1} parent=1 // pred_check_branch
      %37 = sbr.rel (0) target = $region25
    $region24: #{highway_discriminator_forward.1} parent=1 // pred_region
      _
    $region25: #{highway_discriminator_forward.1} parent=1 // pred_fallthru
      _
    // Predicated region
    $region26: #{highway_discriminator_forward.1} parent=1 // pred_check
      _
    $region27: #{highway_discriminator_forward.1} parent=1 // pred_check_branch
      %39 = sbr.rel (0) target = $region29
    $region28: #{highway_discriminator_forward.1} parent=1 // pred_region
      _
    $region29: #{highway_discriminator_forward.1} parent=1 // pred_fallthru
      _
    // Predicated region
    $region30: #{highway_discriminator_forward.1} parent=1 // pred_check
      _
    $region31: #{highway_discriminator_forward.1} parent=1 // pred_check_branch
      %41 = sbr.rel (0) target = $region33
    $region32: #{highway_discriminator_forward.1} parent=1 // pred_region
      %42 = dma.done [#allocation7], 4096
    $region33: #{highway_discriminator_forward.1} parent=1 // pred_fallthru
      _
    %s45 = sshll.u32 1, 14
    %s46 = sxor.u32 4294967295, %s45
    %s48 = sld [smem:[#allocation0]]
    %s49 = sadd.s32 2, %s48
    %s51 = sshll.u32 7, 26
    %s52 = sxor.u32 4294967295, %s51
    %s53 = sand.u32 0, %s52
    %s54 = sshll.u32 %s49, 26
    %s55 = sor.u32 %s53, %s54
    %s56 = sshll.u32 [#allocation3], 4
    %s57 = int_to_ptr.vmem [resolvable:$true] %s56
    %60 = sst [smem:[#allocation9]] 1024
    %s61 = scalar_lea.smem [#allocation9], 1
    %62 = sst [smem:[%s61]] 1024
    %s63 = scalar_lea.smem [#allocation9], 2
    %64 = sst [smem:[%s63]] 8
    %s65 = scalar_lea.smem [#allocation9], 3
    %66 = sst [smem:[%s65]] 64
    %s67 = scalar_lea.smem [#allocation9], 4
    %68 = sst [smem:[%s67]] 128
    %s69 = scalar_lea.smem [#allocation9], 5
    %70 = sst [smem:[%s69]] 2
    %s71 = scalar_lea.smem [#allocation9], 6
    %72 = sst [smem:[%s71]] 512
    %s73 = scalar_lea.smem [#allocation9], 7
    %74 = sst [smem:[%s73]] 64
    %s75 = scalar_lea.smem [#allocation9], 8
    %76 = sst [smem:[%s75]] 4
    %78 = dma.general %s4, 8192, %s57, [#allocation4], [#allocation8], [#allocation9], %s55, 0
    %v79 = vld [vmem:[%s0] sm:$0xff]
    %v80 = vld [vmem:[%s0 + $0x8] sm:$0xff]
    %v81 = vld [vmem:[%s0 + $0x10] sm:$0xff]
    %v82 = vld [vmem:[%s0 + $0x18] sm:$0xff]
    %v83 = vld [vmem:[%s0 + $0x20] sm:$0xff]
    %v84 = vld [vmem:[%s0 + $0x28] sm:$0xff]
    %v85 = vld [vmem:[%s0 + $0x30] sm:$0xff]
    %v86 = vld [vmem:[%s0 + $0x38] sm:$0xff]
    %v87 = vld [vmem:[%s1] ss:$2 sm:$0xf]
    %89 = vset.pattern.permute.xlu0 0
    %90 = vperm.xlu0 %89, %v79
    %v91 = vpop.permute.xlu0 %90
    %94 = vset.pattern.permute.xlu0 0
    %95 = vperm.xlu0 %94, %v80
    %v96 = vpop.permute.xlu0 %95
    %99 = vset.pattern.permute.xlu0 0
    %100 = vperm.xlu0 %99, %v81
    %v101 = vpop.permute.xlu0 %100
    %104 = vset.pattern.permute.xlu0 0
    %105 = vperm.xlu0 %104, %v82
    %v106 = vpop.permute.xlu0 %105
    %109 = vset.pattern.permute.xlu0 0
    %110 = vperm.xlu0 %109, %v83
    %v111 = vpop.permute.xlu0 %110
    %114 = vset.pattern.permute.xlu0 0
    %115 = vperm.xlu0 %114, %v84
    %v116 = vpop.permute.xlu0 %115
    %119 = vset.pattern.permute.xlu0 0
    %120 = vperm.xlu0 %119, %v85
    %v121 = vpop.permute.xlu0 %120
    %124 = vset.pattern.permute.xlu0 0
    %125 = vperm.xlu0 %124, %v86
    %v126 = vpop.permute.xlu0 %125
    %v129 = vlaneseq
    %v130 = vshrl.u32 %v129, 7
    %v131 = vsub.s32 0, %v130
    %v132 = vrot.slane %v87, %v131
    %v133 = vlaneseq
    %v134 = vshrl.u32 %v133, 7
    %v135 = vsub.s32 1, %v134
    %v136 = vrot.slane %v87, %v135
    %v137 = vlaneseq
    %v138 = vshrl.u32 %v137, 7
    %v139 = vsub.s32 2, %v138
    %v140 = vrot.slane %v87, %v139
    %v141 = vlaneseq
    %v142 = vshrl.u32 %v141, 7
    %v143 = vsub.s32 3, %v142
    %v144 = vrot.slane %v87, %v143
    %v149 = vmul.f32 %v91, %v132
    %v150 = vmul.f32 %v91, %v136
    %v151 = vmul.f32 %v91, %v140
    %v152 = vmul.f32 %v91, %v144
    %v153 = vmul.f32 %v96, %v132
    %v154 = vmul.f32 %v96, %v136
    %v155 = vmul.f32 %v96, %v140
    %v156 = vmul.f32 %v96, %v144
    %v157 = vmul.f32 %v101, %v132
    %v158 = vmul.f32 %v101, %v136
    %v159 = vmul.f32 %v101, %v140
    %v160 = vmul.f32 %v101, %v144
    %v161 = vmul.f32 %v106, %v132
    %v162 = vmul.f32 %v106, %v136
    %v163 = vmul.f32 %v106, %v140
    %v164 = vmul.f32 %v106, %v144
    %v165 = vmul.f32 %v111, %v132
    %v166 = vmul.f32 %v111, %v136
    %v167 = vmul.f32 %v111, %v140
    %v168 = vmul.f32 %v111, %v144
    %v169 = vmul.f32 %v116, %v132
    %v170 = vmul.f32 %v116, %v136
    %v171 = vmul.f32 %v116, %v140
    %v172 = vmul.f32 %v116, %v144
    %v173 = vmul.f32 %v121, %v132
    %v174 = vmul.f32 %v121, %v136
    %v175 = vmul.f32 %v121, %v140
    %v176 = vmul.f32 %v121, %v144
    %v177 = vmul.f32 %v126, %v132
    %v178 = vmul.f32 %v126, %v136
    %v179 = vmul.f32 %v126, %v140
    %v180 = vmul.f32 %v126, %v144
    %s181 = scalar_lea.vmem %s1, 1
    %v182 = vld [vmem:[%s181] ss:$2 sm:$0xf]
    %183 = vset.pattern.permute.xlu0 1
    %184 = vperm.xlu0 %183, %v79
    %v185 = vpop.permute.xlu0 %184
    %187 = vset.pattern.permute.xlu0 1
    %188 = vperm.xlu0 %187, %v80
    %v189 = vpop.permute.xlu0 %188
    %191 = vset.pattern.permute.xlu0 1
    %192 = vperm.xlu0 %191, %v81
    %v193 = vpop.permute.xlu0 %192
    %195 = vset.pattern.permute.xlu0 1
    %196 = vperm.xlu0 %195, %v82
    %v197 = vpop.permute.xlu0 %196
    %199 = vset.pattern.permute.xlu0 1
    %200 = vperm.xlu0 %199, %v83
    %v201 = vpop.permute.xlu0 %200
    %203 = vset.pattern.permute.xlu0 1
    %204 = vperm.xlu0 %203, %v84
    %v205 = vpop.permute.xlu0 %204
    %207 = vset.pattern.permute.xlu0 1
    %208 = vperm.xlu0 %207, %v85
    %v209 = vpop.permute.xlu0 %208
    %211 = vset.pattern.permute.xlu0 1
    %212 = vperm.xlu0 %211, %v86
    %v213 = vpop.permute.xlu0 %212
    %v216 = vlaneseq
    %v217 = vshrl.u32 %v216, 7
    %v218 = vsub.s32 0, %v217
    %v219 = vrot.slane %v182, %v218
    %v220 = vlaneseq
    %v221 = vshrl.u32 %v220, 7
    %v222 = vsub.s32 1, %v221
    %v223 = vrot.slane %v182, %v222
    %v224 = vlaneseq
    %v225 = vshrl.u32 %v224, 7
    %v226 = vsub.s32 2, %v225
    %v227 = vrot.slane %v182, %v226
    %v228 = vlaneseq
    %v229 = vshrl.u32 %v228, 7
    %v230 = vsub.s32 3, %v229
    %v231 = vrot.slane %v182, %v230
    %v236 = vmul.f32 %v185, %v219
    %v237 = vmul.f32 %v185, %v223
    %v238 = vmul.f32 %v185, %v227
    %v239 = vmul.f32 %v185, %v231
    %v240 = vmul.f32 %v189, %v219
    %v241 = vmul.f32 %v189, %v223
    %v242 = vmul.f32 %v189, %v227
    %v243 = vmul.f32 %v189, %v231
    %v244 = vmul.f32 %v193, %v219
    %v245 = vmul.f32 %v193, %v223
    %v246 = vmul.f32 %v193, %v227
    %v247 = vmul.f32 %v193, %v231
    %v248 = vmul.f32 %v197, %v219
    %v249 = vmul.f32 %v197, %v223
    %v250 = vmul.f32 %v197, %v227
    %v251 = vmul.f32 %v197, %v231
    %v252 = vmul.f32 %v201, %v219
    %v253 = vmul.f32 %v201, %v223
    %v254 = vmul.f32 %v201, %v227
    %v255 = vmul.f32 %v201, %v231
    %v256 = vmul.f32 %v205, %v219
    %v257 = vmul.f32 %v205, %v223
    %v258 = vmul.f32 %v205, %v227
    %v259 = vmul.f32 %v205, %v231
    %v260 = vmul.f32 %v209, %v219
    %v261 = vmul.f32 %v209, %v223
    %v262 = vmul.f32 %v209, %v227
    %v263 = vmul.f32 %v209, %v231
    %v264 = vmul.f32 %v213, %v219
    %v265 = vmul.f32 %v213, %v223
    %v266 = vmul.f32 %v213, %v227
    %v267 = vmul.f32 %v213, %v231
    %v268 = vadd.f32 %v149, %v236
    %v269 = vadd.f32 %v150, %v237
    %v270 = vadd.f32 %v151, %v238
    %v271 = vadd.f32 %v152, %v239
    %v272 = vadd.f32 %v153, %v240
    %v273 = vadd.f32 %v154, %v241
    %v274 = vadd.f32 %v155, %v242
    %v275 = vadd.f32 %v156, %v243
    %v276 = vadd.f32 %v157, %v244
    %v277 = vadd.f32 %v158, %v245
    %v278 = vadd.f32 %v159, %v246
    %v279 = vadd.f32 %v160, %v247
    %v280 = vadd.f32 %v161, %v248
    %v281 = vadd.f32 %v162, %v249
    %v282 = vadd.f32 %v163, %v250
    %v283 = vadd.f32 %v164, %v251
    %v284 = vadd.f32 %v165, %v252
    %v285 = vadd.f32 %v166, %v253
    %v286 = vadd.f32 %v167, %v254
    %v287 = vadd.f32 %v168, %v255
    %v288 = vadd.f32 %v169, %v256
    %v289 = vadd.f32 %v170, %v257
    %v290 = vadd.f32 %v171, %v258
    %v291 = vadd.f32 %v172, %v259
    %v292 = vadd.f32 %v173, %v260
    %v293 = vadd.f32 %v174, %v261
    %v294 = vadd.f32 %v175, %v262
    %v295 = vadd.f32 %v176, %v263
    %v296 = vadd.f32 %v177, %v264
    %v297 = vadd.f32 %v178, %v265
    %v298 = vadd.f32 %v179, %v266
    %v299 = vadd.f32 %v180, %v267
    %v300 = vld [vmem:[%s2] sm:$0xf]
    %v302 = vlaneseq
    %v303 = vshrl.u32 %v302, 7
    %v304 = vsub.s32 0, %v303
    %v305 = vrot.slane %v300, %v304
    %v306 = vlaneseq
    %v307 = vshrl.u32 %v306, 7
    %v308 = vsub.s32 1, %v307
    %v309 = vrot.slane %v300, %v308
    %v310 = vlaneseq
    %v311 = vshrl.u32 %v310, 7
    %v312 = vsub.s32 2, %v311
    %v313 = vrot.slane %v300, %v312
    %v314 = vlaneseq
    %v315 = vshrl.u32 %v314, 7
    %v316 = vsub.s32 3, %v315
    %v317 = vrot.slane %v300, %v316
    %v322 = vadd.f32 %v268, %v305
    %v323 = vadd.f32 %v269, %v309
    %v324 = vadd.f32 %v270, %v313
    %v325 = vadd.f32 %v271, %v317
    %v326 = vadd.f32 %v272, %v305
    %v327 = vadd.f32 %v273, %v309
    %v328 = vadd.f32 %v274, %v313
    %v329 = vadd.f32 %v275, %v317
    %v330 = vadd.f32 %v276, %v305
    %v331 = vadd.f32 %v277, %v309
    %v332 = vadd.f32 %v278, %v313
    %v333 = vadd.f32 %v279, %v317
    %v334 = vadd.f32 %v280, %v305
    %v335 = vadd.f32 %v281, %v309
    %v336 = vadd.f32 %v282, %v313
    %v337 = vadd.f32 %v283, %v317
    %v338 = vadd.f32 %v284, %v305
    %v339 = vadd.f32 %v285, %v309
    %v340 = vadd.f32 %v286, %v313
    %v341 = vadd.f32 %v287, %v317
    %v342 = vadd.f32 %v288, %v305
    %v343 = vadd.f32 %v289, %v309
    %v344 = vadd.f32 %v290, %v313
    %v345 = vadd.f32 %v291, %v317
    %v346 = vadd.f32 %v292, %v305
    %v347 = vadd.f32 %v293, %v309
    %v348 = vadd.f32 %v294, %v313
    %v349 = vadd.f32 %v295, %v317
    %v350 = vadd.f32 %v296, %v305
    %v351 = vadd.f32 %v297, %v309
    %v352 = vadd.f32 %v298, %v313
    %v353 = vadd.f32 %v299, %v317
    %354 = vst [vmem:[#allocation2] sm:$0xff] %v322
    %355 = vst [vmem:[#allocation2 + $0x8] sm:$0xff] %v323
    %356 = vst [vmem:[#allocation2 + $0x10] sm:$0xff] %v324
    %357 = vst [vmem:[#allocation2 + $0x18] sm:$0xff] %v325
    %358 = vst [vmem:[#allocation2 + $0x20] sm:$0xff] %v326
    %359 = vst [vmem:[#allocation2 + $0x28] sm:$0xff] %v327
    %360 = vst [vmem:[#allocation2 + $0x30] sm:$0xff] %v328
    %361 = vst [vmem:[#allocation2 + $0x38] sm:$0xff] %v329
    %362 = vst [vmem:[#allocation2 + $0x40] sm:$0xff] %v330
    %363 = vst [vmem:[#allocation2 + $0x48] sm:$0xff] %v331
    %364 = vst [vmem:[#allocation2 + $0x50] sm:$0xff] %v332
    %365 = vst [vmem:[#allocation2 + $0x58] sm:$0xff] %v333
    %366 = vst [vmem:[#allocation2 + $0x60] sm:$0xff] %v334
    %367 = vst [vmem:[#allocation2 + $0x68] sm:$0xff] %v335
    %368 = vst [vmem:[#allocation2 + $0x70] sm:$0xff] %v336
    %369 = vst [vmem:[#allocation2 + $0x78] sm:$0xff] %v337
    %370 = vst [vmem:[#allocation2 + $0x80] sm:$0xff] %v338
    %371 = vst [vmem:[#allocation2 + $0x88] sm:$0xff] %v339
    %372 = vst [vmem:[#allocation2 + $0x90] sm:$0xff] %v340
    %373 = vst [vmem:[#allocation2 + $0x98] sm:$0xff] %v341
    %374 = vst [vmem:[#allocation2 + $0xa0] sm:$0xff] %v342
    %375 = vst [vmem:[#allocation2 + $0xa8] sm:$0xff] %v343
    %376 = vst [vmem:[#allocation2 + $0xb0] sm:$0xff] %v344
    %377 = vst [vmem:[#allocation2 + $0xb8] sm:$0xff] %v345
    %378 = vst [vmem:[#allocation2 + $0xc0] sm:$0xff] %v346
    %379 = vst [vmem:[#allocation2 + $0xc8] sm:$0xff] %v347
    %380 = vst [vmem:[#allocation2 + $0xd0] sm:$0xff] %v348
    %381 = vst [vmem:[#allocation2 + $0xd8] sm:$0xff] %v349
    %382 = vst [vmem:[#allocation2 + $0xe0] sm:$0xff] %v350
    %383 = vst [vmem:[#allocation2 + $0xe8] sm:$0xff] %v351
    %384 = vst [vmem:[#allocation2 + $0xf0] sm:$0xff] %v352
    %385 = vst [vmem:[#allocation2 + $0xf8] sm:$0xff] %v353
    %v386 = vld [vmem:[#allocation2] sm:$0xff]
    %v387 = vld [vmem:[#allocation2 + $0x10] sm:$0xff]
    %v388 = vld [vmem:[#allocation2 + $0x18] sm:$0xff]
    %v389 = vmul.f32 %v386, 0.5
    %v390 = vtanh.pop %v389
    %v391 = vadd.f32 %v390, 1.0
    %v392 = vmul.f32 %v391, 0.5
    %v393 = vtanh.pop %v387
    %v394 = vmul.f32 %v388, 0.5
    %v395 = vtanh.pop %v394
    %v396 = vadd.f32 %v395, 1.0
    %v397 = vmul.f32 %v396, 0.5
    %v398 = vmul.f32 %v392, %v393
    %v399 = vtanh.pop %v398
    %v400 = vmul.f32 %v397, %v399
    %v401 = vld [vmem:[#allocation2 + $0x20] sm:$0xff]
    %v402 = vld [vmem:[#allocation2 + $0x28] sm:$0xff]
    %v403 = vld [vmem:[#allocation2 + $0x30] sm:$0xff]
    %v404 = vld [vmem:[#allocation2 + $0x38] sm:$0xff]
    %v405 = vpack.c.bf16 %v400, %v400
    %v406 = vld [vmem:[#allocation6] sm:$0xff]
    %v407 = vld [vmem:[#allocation6 + $0x8] sm:$0xff]
    %v408 = vld [vmem:[#allocation6 + $0x10] sm:$0xff]
    %v409 = vld [vmem:[#allocation6 + $0x18] sm:$0xff]
    %v410 = vld [vmem:[#allocation6 + $0x20] sm:$0xff]
    %v411 = vld [vmem:[#allocation6 + $0x28] sm:$0xff]
    %v412 = vld [vmem:[#allocation6 + $0x30] sm:$0xff]
    %v413 = vld [vmem:[#allocation6 + $0x38] sm:$0xff]
    %v414 = vld [vmem:[#allocation6 + $0x40] sm:$0xff]
    %v415 = vld [vmem:[#allocation6 + $0x48] sm:$0xff]
    %v416 = vld [vmem:[#allocation6 + $0x50] sm:$0xff]
    %v417 = vld [vmem:[#allocation6 + $0x58] sm:$0xff]
    %v418 = vld [vmem:[#allocation6 + $0x60] sm:$0xff]
    %v419 = vld [vmem:[#allocation6 + $0x68] sm:$0xff]
    %v420 = vld [vmem:[#allocation6 + $0x70] sm:$0xff]
    %v421 = vld [vmem:[#allocation6 + $0x78] sm:$0xff]
    %v422 = vld [vmem:[#allocation6 + $0x80] sm:$0xff]
    %v423 = vld [vmem:[#allocation6 + $0x88] sm:$0xff]
    %v424 = vld [vmem:[#allocation6 + $0x90] sm:$0xff]
    %v425 = vld [vmem:[#allocation6 + $0x98] sm:$0xff]
    %v426 = vld [vmem:[#allocation6 + $0xa0] sm:$0xff]
    %v427 = vld [vmem:[#allocation6 + $0xa8] sm:$0xff]
    %v428 = vld [vmem:[#allocation6 + $0xb0] sm:$0xff]
    %v429 = vld [vmem:[#allocation6 + $0xb8] sm:$0xff]
    %v430 = vld [vmem:[#allocation6 + $0xc0] sm:$0xff]
    %v431 = vld [vmem:[#allocation6 + $0xc8] sm:$0xff]
    %v432 = vld [vmem:[#allocation6 + $0xd0] sm:$0xff]
    %v433 = vld [vmem:[#allocation6 + $0xd8] sm:$0xff]
    %v434 = vld [vmem:[#allocation6 + $0xe0] sm:$0xff]
    %v435 = vld [vmem:[#allocation6 + $0xe8] sm:$0xff]
    %v436 = vld [vmem:[#allocation6 + $0xf0] sm:$0xff]
    %v437 = vld [vmem:[#allocation6 + $0xf8] sm:$0xff]
    %v470 = vunpack.c.l.b16 %v406
    %v471 = vunpack.c.h.b16 %v406
    %v472 = vunpack.c.l.b16 %v407
    %v473 = vunpack.c.h.b16 %v407
    %v474 = vunpack.c.l.b16 %v408
    %v475 = vunpack.c.h.b16 %v408
    %v476 = vunpack.c.l.b16 %v409
    %v477 = vunpack.c.h.b16 %v409
    %v478 = vunpack.c.l.b16 %v410
    %v479 = vunpack.c.h.b16 %v410
    %v480 = vunpack.c.l.b16 %v411
    %v481 = vunpack.c.h.b16 %v411
    %v482 = vunpack.c.l.b16 %v412
    %v483 = vunpack.c.h.b16 %v412
    %v484 = vunpack.c.l.b16 %v413
    %v485 = vunpack.c.h.b16 %v413
    %v486 = vunpack.c.l.b16 %v414
    %v487 = vunpack.c.h.b16 %v414
    %v488 = vunpack.c.l.b16 %v415
    %v489 = vunpack.c.h.b16 %v415
    %v490 = vunpack.c.l.b16 %v416
    %v491 = vunpack.c.h.b16 %v416
    %v492 = vunpack.c.l.b16 %v417
    %v493 = vunpack.c.h.b16 %v417
    %v494 = vunpack.c.l.b16 %v418
    %v495 = vunpack.c.h.b16 %v418
    %v496 = vunpack.c.l.b16 %v419
    %v497 = vunpack.c.h.b16 %v419
    %v498 = vunpack.c.l.b16 %v420
    %v499 = vunpack.c.h.b16 %v420
    %v500 = vunpack.c.l.b16 %v421
    %v501 = vunpack.c.h.b16 %v421
    %v502 = vunpack.c.l.b16 %v422
    %v503 = vunpack.c.h.b16 %v422
    %v504 = vunpack.c.l.b16 %v423
    %v505 = vunpack.c.h.b16 %v423
    %v506 = vunpack.c.l.b16 %v424
    %v507 = vunpack.c.h.b16 %v424
    %v508 = vunpack.c.l.b16 %v425
    %v509 = vunpack.c.h.b16 %v425
    %v510 = vunpack.c.l.b16 %v426
    %v511 = vunpack.c.h.b16 %v426
    %v512 = vunpack.c.l.b16 %v427
    %v513 = vunpack.c.h.b16 %v427
    %v514 = vunpack.c.l.b16 %v428
    %v515 = vunpack.c.h.b16 %v428
    %v516 = vunpack.c.l.b16 %v429
    %v517 = vunpack.c.h.b16 %v429
    %v518 = vunpack.c.l.b16 %v430
    %v519 = vunpack.c.h.b16 %v430
    %v520 = vunpack.c.l.b16 %v431
    %v521 = vunpack.c.h.b16 %v431
    %v522 = vunpack.c.l.b16 %v432
    %v523 = vunpack.c.h.b16 %v432
    %v524 = vunpack.c.l.b16 %v433
    %v525 = vunpack.c.h.b16 %v433
    %v526 = vunpack.c.l.b16 %v434
    %v527 = vunpack.c.h.b16 %v434
    %v528 = vunpack.c.l.b16 %v435
    %v529 = vunpack.c.h.b16 %v435
    %v530 = vunpack.c.l.b16 %v436
    %v531 = vunpack.c.h.b16 %v436
    %v532 = vunpack.c.l.b16 %v437
    %v533 = vunpack.c.h.b16 %v437
    %v534 = vpack.c.b16 %v474, %v470
    %v535 = vpack.c.b16 %v475, %v471
    %v536 = vpack.c.b16 %v476, %v472
    %v537 = vpack.c.b16 %v477, %v473
    %v538 = vpack.c.b16 %v482, %v478
    %v539 = vpack.c.b16 %v483, %v479
    %v540 = vpack.c.b16 %v484, %v480
    %v541 = vpack.c.b16 %v485, %v481
    %v542 = vpack.c.b16 %v490, %v486
    %v543 = vpack.c.b16 %v491, %v487
    %v544 = vpack.c.b16 %v492, %v488
    %v545 = vpack.c.b16 %v493, %v489
    %v546 = vpack.c.b16 %v498, %v494
    %v547 = vpack.c.b16 %v499, %v495
    %v548 = vpack.c.b16 %v500, %v496
    %v549 = vpack.c.b16 %v501, %v497
    %v550 = vpack.c.b16 %v506, %v502
    %v551 = vpack.c.b16 %v507, %v503
    %v552 = vpack.c.b16 %v508, %v504
    %v553 = vpack.c.b16 %v509, %v505
    %v554 = vpack.c.b16 %v514, %v510
    %v555 = vpack.c.b16 %v515, %v511
    %v556 = vpack.c.b16 %v516, %v512
    %v557 = vpack.c.b16 %v517, %v513
    %v558 = vpack.c.b16 %v522, %v518
    %v559 = vpack.c.b16 %v523, %v519
    %v560 = vpack.c.b16 %v524, %v520
    %v561 = vpack.c.b16 %v525, %v521
    %v562 = vpack.c.b16 %v530, %v526
    %v563 = vpack.c.b16 %v531, %v527
    %v564 = vpack.c.b16 %v532, %v528
    %v565 = vpack.c.b16 %v533, %v529
    %598 = vmatprep.subr.bf16.mxu0 %v535
    %599 = vmatpush1.bf16.msra.mxu0 %v534
    %600 = vmatprep.subr.bf16.mxu0 %v539
    %601 = vmatpush1.bf16.msra.mxu0 %v538
    %602 = vmatprep.subr.bf16.mxu0 %v543
    %603 = vmatpush1.bf16.msra.mxu0 %v542
    %604 = vmatprep.subr.bf16.mxu0 %v547
    %605 = vmatpush1.bf16.msra.mxu0 %v546
    %606 = vmatprep.subr.bf16.mxu0 %v551
    %607 = vmatpush1.bf16.msra.mxu0 %v550
    %608 = vmatprep.subr.bf16.mxu0 %v555
    %609 = vmatpush1.bf16.msra.mxu0 %v554
    %610 = vmatprep.subr.bf16.mxu0 %v559
    %611 = vmatpush1.bf16.msra.mxu0 %v558
    %612 = vmatprep.subr.bf16.mxu0 %v563
    %613 = vmatpush1.bf16.msra.mxu0 %v562
    %614 = vmatprep.subr.bf16.mxu0 0
    %615 = vmatpush1.bf16.msra.mxu0 0
    %616 = vmatprep.subr.bf16.mxu0 0
    %617 = vmatpush1.bf16.msra.mxu0 0
    %618 = vmatprep.subr.bf16.mxu0 0
    %619 = vmatpush1.bf16.msra.mxu0 0
    %620 = vmatprep.subr.bf16.mxu0 0
    %621 = vmatpush1.bf16.msra.mxu0 0
    %622 = vmatprep.subr.bf16.mxu0 0
    %623 = vmatpush1.bf16.msra.mxu0 0
    %624 = vmatprep.subr.bf16.mxu0 0
    %625 = vmatpush1.bf16.msra.mxu0 0
    %626 = vmatprep.subr.bf16.mxu0 0
    %627 = vmatpush1.bf16.msra.mxu0 0
    %628 = vmatprep.subr.bf16.mxu0 0
    %629 = vmatpush1.bf16.msra.mxu0 0
    %630 = vmatprep.mubr.bf16.mxu0 0
    %631 = vmatmul.mubr.bf16.gmra.mrb[0].mxu0 %v405
    %v632 = vpop.f32.mrb[0].mxu0
    %v633 = vadd.f32 0.0, %v632
    %v634 = vpop.f32.mrb[0].mxu0
    %v635 = vadd.f32 0.0, %v634
    %v636 = vpop.f32.mrb[0].mxu0
    %v637 = vpop.f32.mrb[0].mxu0
    %638 = vdwg.mxu0
    %639 = vmatprep.subr.bf16.mxu0 %v537
    %640 = vmatpush1.bf16.msra.mxu0 %v536
    %641 = vmatprep.subr.bf16.mxu0 %v541
    %642 = vmatpush1.bf16.msra.mxu0 %v540
    %643 = vmatprep.subr.bf16.mxu0 %v545
    %644 = vmatpush1.bf16.msra.mxu0 %v544
    %645 = vmatprep.subr.bf16.mxu0 %v549
    %646 = vmatpush1.bf16.msra.mxu0 %v548
    %647 = vmatprep.subr.bf16.mxu0 %v553
    %648 = vmatpush1.bf16.msra.mxu0 %v552
    %649 = vmatprep.subr.bf16.mxu0 %v557
    %650 = vmatpush1.bf16.msra.mxu0 %v556
    %651 = vmatprep.subr.bf16.mxu0 %v561
    %652 = vmatpush1.bf16.msra.mxu0 %v560
    %653 = vmatprep.subr.bf16.mxu0 %v565
    %654 = vmatpush1.bf16.msra.mxu0 %v564
    %655 = vmatprep.subr.bf16.mxu0 0
    %656 = vmatpush1.bf16.msra.mxu0 0
    %657 = vmatprep.subr.bf16.mxu0 0
    %658 = vmatpush1.bf16.msra.mxu0 0
    %659 = vmatprep.subr.bf16.mxu0 0
    %660 = vmatpush1.bf16.msra.mxu0 0
    %661 = vmatprep.subr.bf16.mxu0 0
    %662 = vmatpush1.bf16.msra.mxu0 0
    %663 = vmatprep.subr.bf16.mxu0 0
    %664 = vmatpush1.bf16.msra.mxu0 0
    %665 = vmatprep.subr.bf16.mxu0 0
    %666 = vmatpush1.bf16.msra.mxu0 0
    %667 = vmatprep.subr.bf16.mxu0 0
    %668 = vmatpush1.bf16.msra.mxu0 0
    %669 = vmatprep.subr.bf16.mxu0 0
    %670 = vmatpush1.bf16.msra.mxu0 0
    %671 = vmatprep.mubr.bf16.mxu0 0
    %672 = vmatmul.mubr.bf16.gmra.mrb[0].mxu0 %v405
    %v673 = vpop.f32.mrb[0].mxu0
    %v674 = vadd.f32 0.0, %v673
    %v675 = vpop.f32.mrb[0].mxu0
    %v676 = vadd.f32 0.0, %v675
    %v677 = vpop.f32.mrb[0].mxu0
    %v678 = vpop.f32.mrb[0].mxu0
    %679 = vdwg.mxu0
    %v680 = vadd.f32 %v401, %v633
    %v681 = vadd.f32 %v402, %v635
    %v682 = vadd.f32 %v403, %v674
    %v683 = vadd.f32 %v404, %v676
    %v684 = vmul.f32 %v680, 0.5
    %v685 = vtanh.pop %v684
    %v686 = vadd.f32 %v685, 1.0
    %v687 = vmul.f32 %v686, 0.5
    %v688 = vmul.f32 %v681, 0.5
    %v689 = vtanh.pop %v688
    %v690 = vadd.f32 %v689, 1.0
    %v691 = vmul.f32 %v690, 0.5
    %v692 = vtanh.pop %v682
    %v693 = vmul.f32 %v683, 0.5
    %v694 = vtanh.pop %v693
    %v695 = vadd.f32 %v694, 1.0
    %v696 = vmul.f32 %v695, 0.5
    %v697 = vmul.f32 %v691, %v398
    %v698 = vmul.f32 %v687, %v692
    %v699 = vadd.f32 %v697, %v698
    %v700 = vtanh.pop %v699
    %v701 = vmul.f32 %v696, %v700
    %v702 = vld [vmem:[#allocation2 + $0x40] sm:$0xff]
    %v703 = vld [vmem:[#allocation2 + $0x48] sm:$0xff]
    %v704 = vld [vmem:[#allocation2 + $0x50] sm:$0xff]
    %v705 = vld [vmem:[#allocation2 + $0x58] sm:$0xff]
    %v706 = vpack.c.bf16 %v701, %v701
    %707 = vmatprep.subr.bf16.mxu0 %v535
    %708 = vmatpush1.bf16.msra.mxu0 %v534
    %709 = vmatprep.subr.bf16.mxu0 %v539
    %710 = vmatpush1.bf16.msra.mxu0 %v538
    %711 = vmatprep.subr.bf16.mxu0 %v543
    %712 = vmatpush1.bf16.msra.mxu0 %v542
    %713 = vmatprep.subr.bf16.mxu0 %v547
    %714 = vmatpush1.bf16.msra.mxu0 %v546
    %715 = vmatprep.subr.bf16.mxu0 %v551
    %716 = vmatpush1.bf16.msra.mxu0 %v550
    %717 = vmatprep.subr.bf16.mxu0 %v555
    %718 = vmatpush1.bf16.msra.mxu0 %v554
    %719 = vmatprep.subr.bf16.mxu0 %v559
    %720 = vmatpush1.bf16.msra.mxu0 %v558
    %721 = vmatprep.subr.bf16.mxu0 %v563
    %722 = vmatpush1.bf16.msra.mxu0 %v562
    %723 = vmatprep.subr.bf16.mxu0 0
    %724 = vmatpush1.bf16.msra.mxu0 0
    %725 = vmatprep.subr.bf16.mxu0 0
    %726 = vmatpush1.bf16.msra.mxu0 0
    %727 = vmatprep.subr.bf16.mxu0 0
    %728 = vmatpush1.bf16.msra.mxu0 0
    %729 = vmatprep.subr.bf16.mxu0 0
    %730 = vmatpush1.bf16.msra.mxu0 0
    %731 = vmatprep.subr.bf16.mxu0 0
    %732 = vmatpush1.bf16.msra.mxu0 0
    %733 = vmatprep.subr.bf16.mxu0 0
    %734 = vmatpush1.bf16.msra.mxu0 0
    %735 = vmatprep.subr.bf16.mxu0 0
    %736 = vmatpush1.bf16.msra.mxu0 0
    %737 = vmatprep.subr.bf16.mxu0 0
    %738 = vmatpush1.bf16.msra.mxu0 0
    %739 = vmatprep.mubr.bf16.mxu0 0
    %740 = vmatmul.mubr.bf16.gmra.mrb[0].mxu0 %v706
    %v741 = vpop.f32.mrb[0].mxu0
    %v742 = vadd.f32 0.0, %v741
    %v743 = vpop.f32.mrb[0].mxu0
    %v744 = vadd.f32 0.0, %v743
    %v745 = vpop.f32.mrb[0].mxu0
    %v746 = vpop.f32.mrb[0].mxu0
    %747 = vdwg.mxu0
    %748 = vmatprep.subr.bf16.mxu0 %v537
    %749 = vmatpush1.bf16.msra.mxu0 %v536
    %750 = vmatprep.subr.bf16.mxu0 %v541
    %751 = vmatpush1.bf16.msra.mxu0 %v540
    %752 = vmatprep.subr.bf16.mxu0 %v545
    %753 = vmatpush1.bf16.msra.mxu0 %v544
    %754 = vmatprep.subr.bf16.mxu0 %v549
    %755 = vmatpush1.bf16.msra.mxu0 %v548
    %756 = vmatprep.subr.bf16.mxu0 %v553
    %757 = vmatpush1.bf16.msra.mxu0 %v552
    %758 = vmatprep.subr.bf16.mxu0 %v557
    %759 = vmatpush1.bf16.msra.mxu0 %v556
    %760 = vmatprep.subr.bf16.mxu0 %v561
    %761 = vmatpush1.bf16.msra.mxu0 %v560
    %762 = vmatprep.subr.bf16.mxu0 %v565
    %763 = vmatpush1.bf16.msra.mxu0 %v564
    %764 = vmatprep.subr.bf16.mxu0 0
    %765 = vmatpush1.bf16.msra.mxu0 0
    %766 = vmatprep.subr.bf16.mxu0 0
    %767 = vmatpush1.bf16.msra.mxu0 0
    %768 = vmatprep.subr.bf16.mxu0 0
    %769 = vmatpush1.bf16.msra.mxu0 0
    %770 = vmatprep.subr.bf16.mxu0 0
    %771 = vmatpush1.bf16.msra.mxu0 0
    %772 = vmatprep.subr.bf16.mxu0 0
    %773 = vmatpush1.bf16.msra.mxu0 0
    %774 = vmatprep.subr.bf16.mxu0 0
    %775 = vmatpush1.bf16.msra.mxu0 0
    %776 = vmatprep.subr.bf16.mxu0 0
    %777 = vmatpush1.bf16.msra.mxu0 0
    %778 = vmatprep.subr.bf16.mxu0 0
    %779 = vmatpush1.bf16.msra.mxu0 0
    %780 = vmatprep.mubr.bf16.mxu0 0
    %781 = vmatmul.mubr.bf16.gmra.mrb[0].mxu0 %v706
    %v782 = vpop.f32.mrb[0].mxu0
    %v783 = vadd.f32 0.0, %v782
    %v784 = vpop.f32.mrb[0].mxu0
    %v785 = vadd.f32 0.0, %v784
    %v786 = vpop.f32.mrb[0].mxu0
    %v787 = vpop.f32.mrb[0].mxu0
    %788 = vdwg.mxu0
    %v789 = vadd.f32 %v702, %v742
    %v790 = vadd.f32 %v703, %v744
    %v791 = vadd.f32 %v704, %v783
    %v792 = vadd.f32 %v705, %v785
    %v793 = vmul.f32 %v789, 0.5
    %v794 = vtanh.pop %v793
    %v795 = vadd.f32 %v794, 1.0
    %v796 = vmul.f32 %v795, 0.5
    %v797 = vmul.f32 %v790, 0.5
    %v798 = vtanh.pop %v797
    %v799 = vadd.f32 %v798, 1.0
    %v800 = vmul.f32 %v799, 0.5
    %v801 = vtanh.pop %v791
    %v802 = vmul.f32 %v792, 0.5
    %v803 = vtanh.pop %v802
    %v804 = vadd.f32 %v803, 1.0
    %v805 = vmul.f32 %v804, 0.5
    %v806 = vmul.f32 %v800, %v699
    %v807 = vmul.f32 %v796, %v801
    %v808 = vadd.f32 %v806, %v807
    %v809 = vtanh.pop %v808
    %v810 = vmul.f32 %v805, %v809
    %v811 = vld [vmem:[#allocation2 + $0x60] sm:$0xff]
    %v812 = vld [vmem:[#allocation2 + $0x68] sm:$0xff]
    %v813 = vld [vmem:[#allocation2 + $0x70] sm:$0xff]
    %v814 = vld [vmem:[#allocation2 + $0x78] sm:$0xff]
    %v815 = vpack.c.bf16 %v810, %v810
    %816 = vmatprep.subr.bf16.mxu0 %v535
    %817 = vmatpush1.bf16.msra.mxu0 %v534
    %818 = vmatprep.subr.bf16.mxu0 %v539
    %819 = vmatpush1.bf16.msra.mxu0 %v538
    %820 = vmatprep.subr.bf16.mxu0 %v543
    %821 = vmatpush1.bf16.msra.mxu0 %v542
    %822 = vmatprep.subr.bf16.mxu0 %v547
    %823 = vmatpush1.bf16.msra.mxu0 %v546
    %824 = vmatprep.subr.bf16.mxu0 %v551
    %825 = vmatpush1.bf16.msra.mxu0 %v550
    %826 = vmatprep.subr.bf16.mxu0 %v555
    %827 = vmatpush1.bf16.msra.mxu0 %v554
    %828 = vmatprep.subr.bf16.mxu0 %v559
    %829 = vmatpush1.bf16.msra.mxu0 %v558
    %830 = vmatprep.subr.bf16.mxu0 %v563
    %831 = vmatpush1.bf16.msra.mxu0 %v562
    %832 = vmatprep.subr.bf16.mxu0 0
    %833 = vmatpush1.bf16.msra.mxu0 0
    %834 = vmatprep.subr.bf16.mxu0 0
    %835 = vmatpush1.bf16.msra.mxu0 0
    %836 = vmatprep.subr.bf16.mxu0 0
    %837 = vmatpush1.bf16.msra.mxu0 0
    %838 = vmatprep.subr.bf16.mxu0 0
    %839 = vmatpush1.bf16.msra.mxu0 0
    %840 = vmatprep.subr.bf16.mxu0 0
    %841 = vmatpush1.bf16.msra.mxu0 0
    %842 = vmatprep.subr.bf16.mxu0 0
    %843 = vmatpush1.bf16.msra.mxu0 0
    %844 = vmatprep.subr.bf16.mxu0 0
    %845 = vmatpush1.bf16.msra.mxu0 0
    %846 = vmatprep.subr.bf16.mxu0 0
    %847 = vmatpush1.bf16.msra.mxu0 0
    %848 = vmatprep.mubr.bf16.mxu0 0
    %849 = vmatmul.mubr.bf16.gmra.mrb[0].mxu0 %v815
    %v850 = vpop.f32.mrb[0].mxu0
    %v851 = vadd.f32 0.0, %v850
    %v852 = vpop.f32.mrb[0].mxu0
    %v853 = vadd.f32 0.0, %v852
    %v854 = vpop.f32.mrb[0].mxu0
    %v855 = vpop.f32.mrb[0].mxu0
    %856 = vdwg.mxu0
    %857 = vmatprep.subr.bf16.mxu0 %v537
    %858 = vmatpush1.bf16.msra.mxu0 %v536
    %859 = vmatprep.subr.bf16.mxu0 %v541
    %860 = vmatpush1.bf16.msra.mxu0 %v540
    %861 = vmatprep.subr.bf16.mxu0 %v545
    %862 = vmatpush1.bf16.msra.mxu0 %v544
    %863 = vmatprep.subr.bf16.mxu0 %v549
    %864 = vmatpush1.bf16.msra.mxu0 %v548
    %865 = vmatprep.subr.bf16.mxu0 %v553
    %866 = vmatpush1.bf16.msra.mxu0 %v552
    %867 = vmatprep.subr.bf16.mxu0 %v557
    %868 = vmatpush1.bf16.msra.mxu0 %v556
    %869 = vmatprep.subr.bf16.mxu0 %v561
    %870 = vmatpush1.bf16.msra.mxu0 %v560
    %871 = vmatprep.subr.bf16.mxu0 %v565
    %872 = vmatpush1.bf16.msra.mxu0 %v564
    %873 = vmatprep.subr.bf16.mxu0 0
    %874 = vmatpush1.bf16.msra.mxu0 0
    %875 = vmatprep.subr.bf16.mxu0 0
    %876 = vmatpush1.bf16.msra.mxu0 0
    %877 = vmatprep.subr.bf16.mxu0 0
    %878 = vmatpush1.bf16.msra.mxu0 0
    %879 = vmatprep.subr.bf16.mxu0 0
    %880 = vmatpush1.bf16.msra.mxu0 0
    %881 = vmatprep.subr.bf16.mxu0 0
    %882 = vmatpush1.bf16.msra.mxu0 0
    %883 = vmatprep.subr.bf16.mxu0 0
    %884 = vmatpush1.bf16.msra.mxu0 0
    %885 = vmatprep.subr.bf16.mxu0 0
    %886 = vmatpush1.bf16.msra.mxu0 0
    %887 = vmatprep.subr.bf16.mxu0 0
    %888 = vmatpush1.bf16.msra.mxu0 0
    %889 = vmatprep.mubr.bf16.mxu0 0
    %890 = vmatmul.mubr.bf16.gmra.mrb[0].mxu0 %v815
    %v891 = vpop.f32.mrb[0].mxu0
    %v892 = vadd.f32 0.0, %v891
    %v893 = vpop.f32.mrb[0].mxu0
    %v894 = vadd.f32 0.0, %v893
    %v895 = vpop.f32.mrb[0].mxu0
    %v896 = vpop.f32.mrb[0].mxu0
    %897 = vdwg.mxu0
    %v898 = vadd.f32 %v811, %v851
    %v899 = vadd.f32 %v812, %v853
    %v900 = vadd.f32 %v813, %v892
    %v901 = vadd.f32 %v814, %v894
    %v902 = vmul.f32 %v898, 0.5
    %v903 = vtanh.pop %v902
    %v904 = vadd.f32 %v903, 1.0
    %v905 = vmul.f32 %v904, 0.5
    %v906 = vmul.f32 %v899, 0.5
    %v907 = vtanh.pop %v906
    %v908 = vadd.f32 %v907, 1.0
    %v909 = vmul.f32 %v908, 0.5
    %v910 = vtanh.pop %v900
    %v911 = vmul.f32 %v901, 0.5
    %v912 = vtanh.pop %v911
    %v913 = vadd.f32 %v912, 1.0
    %v914 = vmul.f32 %v913, 0.5
    %v915 = vmul.f32 %v909, %v808
    %v916 = vmul.f32 %v905, %v910
    %v917 = vadd.f32 %v915, %v916
    %v918 = vtanh.pop %v917
    %v919 = vmul.f32 %v914, %v918
    %v920 = vld [vmem:[#allocation2 + $0x80] sm:$0xff]
    %v921 = vld [vmem:[#allocation2 + $0x88] sm:$0xff]
    %v922 = vld [vmem:[#allocation2 + $0x90] sm:$0xff]
    %v923 = vld [vmem:[#allocation2 + $0x98] sm:$0xff]
    %v924 = vpack.c.bf16 %v919, %v919
    %925 = vmatprep.subr.bf16.mxu0 %v535
    %926 = vmatpush1.bf16.msra.mxu0 %v534
    %927 = vmatprep.subr.bf16.mxu0 %v539
    %928 = vmatpush1.bf16.msra.mxu0 %v538
    %929 = vmatprep.subr.bf16.mxu0 %v543
    %930 = vmatpush1.bf16.msra.mxu0 %v542
    %931 = vmatprep.subr.bf16.mxu0 %v547
    %932 = vmatpush1.bf16.msra.mxu0 %v546
    %933 = vmatprep.subr.bf16.mxu0 %v551
    %934 = vmatpush1.bf16.msra.mxu0 %v550
    %935 = vmatprep.subr.bf16.mxu0 %v555
    %936 = vmatpush1.bf16.msra.mxu0 %v554
    %937 = vmatprep.subr.bf16.mxu0 %v559
    %938 = vmatpush1.bf16.msra.mxu0 %v558
    %939 = vmatprep.subr.bf16.mxu0 %v563
    %940 = vmatpush1.bf16.msra.mxu0 %v562
    %941 = vmatprep.subr.bf16.mxu0 0
    %942 = vmatpush1.bf16.msra.mxu0 0
    %943 = vmatprep.subr.bf16.mxu0 0
    %944 = vmatpush1.bf16.msra.mxu0 0
    %945 = vmatprep.subr.bf16.mxu0 0
    %946 = vmatpush1.bf16.msra.mxu0 0
    %947 = vmatprep.subr.bf16.mxu0 0
    %948 = vmatpush1.bf16.msra.mxu0 0
    %949 = vmatprep.subr.bf16.mxu0 0
    %950 = vmatpush1.bf16.msra.mxu0 0
    %951 = vmatprep.subr.bf16.mxu0 0
    %952 = vmatpush1.bf16.msra.mxu0 0
    %953 = vmatprep.subr.bf16.mxu0 0
    %954 = vmatpush1.bf16.msra.mxu0 0
    %955 = vmatprep.subr.bf16.mxu0 0
    %956 = vmatpush1.bf16.msra.mxu0 0
    %957 = vmatprep.mubr.bf16.mxu0 0
    %958 = vmatmul.mubr.bf16.gmra.mrb[0].mxu0 %v924
    %v959 = vpop.f32.mrb[0].mxu0
    %v960 = vadd.f32 0.0, %v959
    %v961 = vpop.f32.mrb[0].mxu0
    %v962 = vadd.f32 0.0, %v961
    %v963 = vpop.f32.mrb[0].mxu0
    %v964 = vpop.f32.mrb[0].mxu0
    %965 = vdwg.mxu0
    %966 = vmatprep.subr.bf16.mxu0 %v537
    %967 = vmatpush1.bf16.msra.mxu0 %v536
    %968 = vmatprep.subr.bf16.mxu0 %v541
    %969 = vmatpush1.bf16.msra.mxu0 %v540
    %970 = vmatprep.subr.bf16.mxu0 %v545
    %971 = vmatpush1.bf16.msra.mxu0 %v544
    %972 = vmatprep.subr.bf16.mxu0 %v549
    %973 = vmatpush1.bf16.msra.mxu0 %v548
    %974 = vmatprep.subr.bf16.mxu0 %v553
    %975 = vmatpush1.bf16.msra.mxu0 %v552
    %976 = vmatprep.subr.bf16.mxu0 %v557
    %977 = vmatpush1.bf16.msra.mxu0 %v556
    %978 = vmatprep.subr.bf16.mxu0 %v561
    %979 = vmatpush1.bf16.msra.mxu0 %v560
    %980 = vmatprep.subr.bf16.mxu0 %v565
    %981 = vmatpush1.bf16.msra.mxu0 %v564
    %982 = vmatprep.subr.bf16.mxu0 0
    %983 = vmatpush1.bf16.msra.mxu0 0
    %984 = vmatprep.subr.bf16.mxu0 0
    %985 = vmatpush1.bf16.msra.mxu0 0
    %986 = vmatprep.subr.bf16.mxu0 0
    %987 = vmatpush1.bf16.msra.mxu0 0
    %988 = vmatprep.subr.bf16.mxu0 0
    %989 = vmatpush1.bf16.msra.mxu0 0
    %990 = vmatprep.subr.bf16.mxu0 0
    %991 = vmatpush1.bf16.msra.mxu0 0
    %992 = vmatprep.subr.bf16.mxu0 0
    %993 = vmatpush1.bf16.msra.mxu0 0
    %994 = vmatprep.subr.bf16.mxu0 0
    %995 = vmatpush1.bf16.msra.mxu0 0
    %996 = vmatprep.subr.bf16.mxu0 0
    %997 = vmatpush1.bf16.msra.mxu0 0
    %998 = vmatprep.mubr.bf16.mxu0 0
    %999 = vmatmul.mubr.bf16.gmra.mrb[0].mxu0 %v924
    %v1000 = vpop.f32.mrb[0].mxu0
    %v1001 = vadd.f32 0.0, %v1000
    %v1002 = vpop.f32.mrb[0].mxu0
    %v1003 = vadd.f32 0.0, %v1002
    %v1004 = vpop.f32.mrb[0].mxu0
    %v1005 = vpop.f32.mrb[0].mxu0
    %1006 = vdwg.mxu0
    %v1007 = vadd.f32 %v920, %v960
    %v1008 = vadd.f32 %v921, %v962
    %v1009 = vadd.f32 %v922, %v1001
    %v1010 = vadd.f32 %v923, %v1003
    %v1011 = vmul.f32 %v1007, 0.5
    %v1012 = vtanh.pop %v1011
    %v1013 = vadd.f32 %v1012, 1.0
    %v1014 = vmul.f32 %v1013, 0.5
    %v1015 = vmul.f32 %v1008, 0.5
    %v1016 = vtanh.pop %v1015
    %v1017 = vadd.f32 %v1016, 1.0
    %v1018 = vmul.f32 %v1017, 0.5
    %v1019 = vtanh.pop %v1009
    %v1020 = vmul.f32 %v1010, 0.5
    %v1021 = vtanh.pop %v1020
    %v1022 = vadd.f32 %v1021, 1.0
    %v1023 = vmul.f32 %v1022, 0.5
    %v1024 = vmul.f32 %v1018, %v917
    %v1025 = vmul.f32 %v1014, %v1019
    %v1026 = vadd.f32 %v1024, %v1025
    %v1027 = vtanh.pop %v1026
    %v1028 = vmul.f32 %v1023, %v1027
    %v1029 = vld [vmem:[#allocation2 + $0xa0] sm:$0xff]
    %v1030 = vld [vmem:[#allocation2 + $0xa8] sm:$0xff]
    %v1031 = vld [vmem:[#allocation2 + $0xb0] sm:$0xff]
    %v1032 = vld [vmem:[#allocation2 + $0xb8] sm:$0xff]
    %v1033 = vpack.c.bf16 %v1028, %v1028
    %1034 = vmatprep.subr.bf16.mxu0 %v535
    %1035 = vmatpush1.bf16.msra.mxu0 %v534
    %1036 = vmatprep.subr.bf16.mxu0 %v539
    %1037 = vmatpush1.bf16.msra.mxu0 %v538
    %1038 = vmatprep.subr.bf16.mxu0 %v543
    %1039 = vmatpush1.bf16.msra.mxu0 %v542
    %1040 = vmatprep.subr.bf16.mxu0 %v547
    %1041 = vmatpush1.bf16.msra.mxu0 %v546
    %1042 = vmatprep.subr.bf16.mxu0 %v551
    %1043 = vmatpush1.bf16.msra.mxu0 %v550
    %1044 = vmatprep.subr.bf16.mxu0 %v555
    %1045 = vmatpush1.bf16.msra.mxu0 %v554
    %1046 = vmatprep.subr.bf16.mxu0 %v559
    %1047 = vmatpush1.bf16.msra.mxu0 %v558
    %1048 = vmatprep.subr.bf16.mxu0 %v563
    %1049 = vmatpush1.bf16.msra.mxu0 %v562
    %1050 = vmatprep.subr.bf16.mxu0 0
    %1051 = vmatpush1.bf16.msra.mxu0 0
    %1052 = vmatprep.subr.bf16.mxu0 0
    %1053 = vmatpush1.bf16.msra.mxu0 0
    %1054 = vmatprep.subr.bf16.mxu0 0
    %1055 = vmatpush1.bf16.msra.mxu0 0
    %1056 = vmatprep.subr.bf16.mxu0 0
    %1057 = vmatpush1.bf16.msra.mxu0 0
    %1058 = vmatprep.subr.bf16.mxu0 0
    %1059 = vmatpush1.bf16.msra.mxu0 0
    %1060 = vmatprep.subr.bf16.mxu0 0
    %1061 = vmatpush1.bf16.msra.mxu0 0
    %1062 = vmatprep.subr.bf16.mxu0 0
    %1063 = vmatpush1.bf16.msra.mxu0 0
    %1064 = vmatprep.subr.bf16.mxu0 0
    %1065 = vmatpush1.bf16.msra.mxu0 0
    %1066 = vmatprep.mubr.bf16.mxu0 0
    %1067 = vmatmul.mubr.bf16.gmra.mrb[0].mxu0 %v1033
    %v1068 = vpop.f32.mrb[0].mxu0
    %v1069 = vadd.f32 0.0, %v1068
    %v1070 = vpop.f32.mrb[0].mxu0
    %v1071 = vadd.f32 0.0, %v1070
    %v1072 = vpop.f32.mrb[0].mxu0
    %v1073 = vpop.f32.mrb[0].mxu0
    %1074 = vdwg.mxu0
    %1075 = vmatprep.subr.bf16.mxu0 %v537
    %1076 = vmatpush1.bf16.msra.mxu0 %v536
    %1077 = vmatprep.subr.bf16.mxu0 %v541
    %1078 = vmatpush1.bf16.msra.mxu0 %v540
    %1079 = vmatprep.subr.bf16.mxu0 %v545
    %1080 = vmatpush1.bf16.msra.mxu0 %v544
    %1081 = vmatprep.subr.bf16.mxu0 %v549
    %1082 = vmatpush1.bf16.msra.mxu0 %v548
    %1083 = vmatprep.subr.bf16.mxu0 %v553
    %1084 = vmatpush1.bf16.msra.mxu0 %v552
    %1085 = vmatprep.subr.bf16.mxu0 %v557
    %1086 = vmatpush1.bf16.msra.mxu0 %v556
    %1087 = vmatprep.subr.bf16.mxu0 %v561
    %1088 = vmatpush1.bf16.msra.mxu0 %v560
    %1089 = vmatprep.subr.bf16.mxu0 %v565
    %1090 = vmatpush1.bf16.msra.mxu0 %v564
    %1091 = vmatprep.subr.bf16.mxu0 0
    %1092 = vmatpush1.bf16.msra.mxu0 0
    %1093 = vmatprep.subr.bf16.mxu0 0
    %1094 = vmatpush1.bf16.msra.mxu0 0
    %1095 = vmatprep.subr.bf16.mxu0 0
    %1096 = vmatpush1.bf16.msra.mxu0 0
    %1097 = vmatprep.subr.bf16.mxu0 0
    %1098 = vmatpush1.bf16.msra.mxu0 0
    %1099 = vmatprep.subr.bf16.mxu0 0
    %1100 = vmatpush1.bf16.msra.mxu0 0
    %1101 = vmatprep.subr.bf16.mxu0 0
    %1102 = vmatpush1.bf16.msra.mxu0 0
    %1103 = vmatprep.subr.bf16.mxu0 0
    %1104 = vmatpush1.bf16.msra.mxu0 0
    %1105 = vmatprep.subr.bf16.mxu0 0
    %1106 = vmatpush1.bf16.msra.mxu0 0
    %1107 = vmatprep.mubr.bf16.mxu0 0
    %1108 = vmatmul.mubr.bf16.gmra.mrb[0].mxu0 %v1033
    %v1109 = vpop.f32.mrb[0].mxu0
    %v1110 = vadd.f32 0.0, %v1109
    %v1111 = vpop.f32.mrb[0].mxu0
    %v1112 = vadd.f32 0.0, %v1111
    %v1113 = vpop.f32.mrb[0].mxu0
    %v1114 = vpop.f32.mrb[0].mxu0
    %1115 = vdwg.mxu0
    %v1116 = vadd.f32 %v1029, %v1069
    %v1117 = vadd.f32 %v1030, %v1071
    %v1118 = vadd.f32 %v1031, %v1110
    %v1119 = vadd.f32 %v1032, %v1112
    %v1120 = vmul.f32 %v1116, 0.5
    %v1121 = vtanh.pop %v1120
    %v1122 = vadd.f32 %v1121, 1.0
    %v1123 = vmul.f32 %v1122, 0.5
    %v1124 = vmul.f32 %v1117, 0.5
    %v1125 = vtanh.pop %v1124
    %v1126 = vadd.f32 %v1125, 1.0
    %v1127 = vmul.f32 %v1126, 0.5
    %v1128 = vtanh.pop %v1118
    %v1129 = vmul.f32 %v1119, 0.5
    %v1130 = vtanh.pop %v1129
    %v1131 = vadd.f32 %v1130, 1.0
    %v1132 = vmul.f32 %v1131, 0.5
    %v1133 = vmul.f32 %v1127, %v1026
    %v1134 = vmul.f32 %v1123, %v1128
    %v1135 = vadd.f32 %v1133, %v1134
    %v1136 = vtanh.pop %v1135
    %v1137 = vmul.f32 %v1132, %v1136
    %v1138 = vld [vmem:[#allocation2 + $0xc0] sm:$0xff]
    %v1139 = vld [vmem:[#allocation2 + $0xc8] sm:$0xff]
    %v1140 = vld [vmem:[#allocation2 + $0xd0] sm:$0xff]
    %v1141 = vld [vmem:[#allocation2 + $0xd8] sm:$0xff]
    %v1142 = vpack.c.bf16 %v1137, %v1137
    %1143 = vmatprep.subr.bf16.mxu0 %v535
    %1144 = vmatpush1.bf16.msra.mxu0 %v534
    %1145 = vmatprep.subr.bf16.mxu0 %v539
    %1146 = vmatpush1.bf16.msra.mxu0 %v538
    %1147 = vmatprep.subr.bf16.mxu0 %v543
    %1148 = vmatpush1.bf16.msra.mxu0 %v542
    %1149 = vmatprep.subr.bf16.mxu0 %v547
    %1150 = vmatpush1.bf16.msra.mxu0 %v546
    %1151 = vmatprep.subr.bf16.mxu0 %v551
    %1152 = vmatpush1.bf16.msra.mxu0 %v550
    %1153 = vmatprep.subr.bf16.mxu0 %v555
    %1154 = vmatpush1.bf16.msra.mxu0 %v554
    %1155 = vmatprep.subr.bf16.mxu0 %v559
    %1156 = vmatpush1.bf16.msra.mxu0 %v558
    %1157 = vmatprep.subr.bf16.mxu0 %v563
    %1158 = vmatpush1.bf16.msra.mxu0 %v562
    %1159 = vmatprep.subr.bf16.mxu0 0
    %1160 = vmatpush1.bf16.msra.mxu0 0
    %1161 = vmatprep.subr.bf16.mxu0 0
    %1162 = vmatpush1.bf16.msra.mxu0 0
    %1163 = vmatprep.subr.bf16.mxu0 0
    %1164 = vmatpush1.bf16.msra.mxu0 0
    %1165 = vmatprep.subr.bf16.mxu0 0
    %1166 = vmatpush1.bf16.msra.mxu0 0
    %1167 = vmatprep.subr.bf16.mxu0 0
    %1168 = vmatpush1.bf16.msra.mxu0 0
    %1169 = vmatprep.subr.bf16.mxu0 0
    %1170 = vmatpush1.bf16.msra.mxu0 0
    %1171 = vmatprep.subr.bf16.mxu0 0
    %1172 = vmatpush1.bf16.msra.mxu0 0
    %1173 = vmatprep.subr.bf16.mxu0 0
    %1174 = vmatpush1.bf16.msra.mxu0 0
    %1175 = vmatprep.mubr.bf16.mxu0 0
    %1176 = vmatmul.mubr.bf16.gmra.mrb[0].mxu0 %v1142
    %v1177 = vpop.f32.mrb[0].mxu0
    %v1178 = vadd.f32 0.0, %v1177
    %v1179 = vpop.f32.mrb[0].mxu0
    %v1180 = vadd.f32 0.0, %v1179
    %v1181 = vpop.f32.mrb[0].mxu0
    %v1182 = vpop.f32.mrb[0].mxu0
    %1183 = vdwg.mxu0
    %1184 = vmatprep.subr.bf16.mxu0 %v537
    %1185 = vmatpush1.bf16.msra.mxu0 %v536
    %1186 = vmatprep.subr.bf16.mxu0 %v541
    %1187 = vmatpush1.bf16.msra.mxu0 %v540
    %1188 = vmatprep.subr.bf16.mxu0 %v545
    %1189 = vmatpush1.bf16.msra.mxu0 %v544
    %1190 = vmatprep.subr.bf16.mxu0 %v549
    %1191 = vmatpush1.bf16.msra.mxu0 %v548
    %1192 = vmatprep.subr.bf16.mxu0 %v553
    %1193 = vmatpush1.bf16.msra.mxu0 %v552
    %1194 = vmatprep.subr.bf16.mxu0 %v557
    %1195 = vmatpush1.bf16.msra.mxu0 %v556
    %1196 = vmatprep.subr.bf16.mxu0 %v561
    %1197 = vmatpush1.bf16.msra.mxu0 %v560
    %1198 = vmatprep.subr.bf16.mxu0 %v565
    %1199 = vmatpush1.bf16.msra.mxu0 %v564
    %1200 = vmatprep.subr.bf16.mxu0 0
    %1201 = vmatpush1.bf16.msra.mxu0 0
    %1202 = vmatprep.subr.bf16.mxu0 0
    %1203 = vmatpush1.bf16.msra.mxu0 0
    %1204 = vmatprep.subr.bf16.mxu0 0
    %1205 = vmatpush1.bf16.msra.mxu0 0
    %1206 = vmatprep.subr.bf16.mxu0 0
    %1207 = vmatpush1.bf16.msra.mxu0 0
    %1208 = vmatprep.subr.bf16.mxu0 0
    %1209 = vmatpush1.bf16.msra.mxu0 0
    %1210 = vmatprep.subr.bf16.mxu0 0
    %1211 = vmatpush1.bf16.msra.mxu0 0
    %1212 = vmatprep.subr.bf16.mxu0 0
    %1213 = vmatpush1.bf16.msra.mxu0 0
    %1214 = vmatprep.subr.bf16.mxu0 0
    %1215 = vmatpush1.bf16.msra.mxu0 0
    %1216 = vmatprep.mubr.bf16.mxu0 0
    %1217 = vmatmul.mubr.bf16.gmra.mrb[0].mxu0 %v1142
    %v1218 = vpop.f32.mrb[0].mxu0
    %v1219 = vadd.f32 0.0, %v1218
    %v1220 = vpop.f32.mrb[0].mxu0
    %v1221 = vadd.f32 0.0, %v1220
    %v1222 = vpop.f32.mrb[0].mxu0
    %v1223 = vpop.f32.mrb[0].mxu0
    %1224 = vdwg.mxu0
    %v1225 = vadd.f32 %v1138, %v1178
    %v1226 = vadd.f32 %v1139, %v1180
    %v1227 = vadd.f32 %v1140, %v1219
    %v1228 = vadd.f32 %v1141, %v1221
    %v1229 = vmul.f32 %v1225, 0.5
    %v1230 = vtanh.pop %v1229
    %v1231 = vadd.f32 %v1230, 1.0
    %v1232 = vmul.f32 %v1231, 0.5
    %v1233 = vmul.f32 %v1226, 0.5
    %v1234 = vtanh.pop %v1233
    %v1235 = vadd.f32 %v1234, 1.0
    %v1236 = vmul.f32 %v1235, 0.5
    %v1237 = vtanh.pop %v1227
    %v1238 = vmul.f32 %v1228, 0.5
    %v1239 = vtanh.pop %v1238
    %v1240 = vadd.f32 %v1239, 1.0
    %v1241 = vmul.f32 %v1240, 0.5
    %v1242 = vmul.f32 %v1236, %v1135
    %v1243 = vmul.f32 %v1232, %v1237
    %v1244 = vadd.f32 %v1242, %v1243
    %v1245 = vtanh.pop %v1244
    %v1246 = vmul.f32 %v1241, %v1245
    %v1247 = vld [vmem:[#allocation2 + $0xe0] sm:$0xff]
    %v1248 = vld [vmem:[#allocation2 + $0xe8] sm:$0xff]
    %v1249 = vld [vmem:[#allocation2 + $0xf0] sm:$0xff]
    %v1250 = vld [vmem:[#allocation2 + $0xf8] sm:$0xff]
    %v1251 = vpack.c.bf16 %v1246, %v1246
    %1252 = vmatprep.subr.bf16.mxu0 %v535
    %1253 = vmatpush1.bf16.msra.mxu0 %v534
    %1254 = vmatprep.subr.bf16.mxu0 %v539
    %1255 = vmatpush1.bf16.msra.mxu0 %v538
    %1256 = vmatprep.subr.bf16.mxu0 %v543
    %1257 = vmatpush1.bf16.msra.mxu0 %v542
    %1258 = vmatprep.subr.bf16.mxu0 %v547
    %1259 = vmatpush1.bf16.msra.mxu0 %v546
    %1260 = vmatprep.subr.bf16.mxu0 %v551
    %1261 = vmatpush1.bf16.msra.mxu0 %v550
    %1262 = vmatprep.subr.bf16.mxu0 %v555
    %1263 = vmatpush1.bf16.msra.mxu0 %v554
    %1264 = vmatprep.subr.bf16.mxu0 %v559
    %1265 = vmatpush1.bf16.msra.mxu0 %v558
    %1266 = vmatprep.subr.bf16.mxu0 %v563
    %1267 = vmatpush1.bf16.msra.mxu0 %v562
    %1268 = vmatprep.subr.bf16.mxu0 0
    %1269 = vmatpush1.bf16.msra.mxu0 0
    %1270 = vmatprep.subr.bf16.mxu0 0
    %1271 = vmatpush1.bf16.msra.mxu0 0
    %1272 = vmatprep.subr.bf16.mxu0 0
    %1273 = vmatpush1.bf16.msra.mxu0 0
    %1274 = vmatprep.subr.bf16.mxu0 0
    %1275 = vmatpush1.bf16.msra.mxu0 0
    %1276 = vmatprep.subr.bf16.mxu0 0
    %1277 = vmatpush1.bf16.msra.mxu0 0
    %1278 = vmatprep.subr.bf16.mxu0 0
    %1279 = vmatpush1.bf16.msra.mxu0 0
    %1280 = vmatprep.subr.bf16.mxu0 0
    %1281 = vmatpush1.bf16.msra.mxu0 0
    %1282 = vmatprep.subr.bf16.mxu0 0
    %1283 = vmatpush1.bf16.msra.mxu0 0
    %1284 = vmatprep.mubr.bf16.mxu0 0
    %1285 = vmatmul.mubr.bf16.gmra.mrb[0].mxu0 %v1251
    %v1286 = vpop.f32.mrb[0].mxu0
    %v1287 = vadd.f32 0.0, %v1286
    %v1288 = vpop.f32.mrb[0].mxu0
    %v1289 = vadd.f32 0.0, %v1288
    %v1290 = vpop.f32.mrb[0].mxu0
    %v1291 = vpop.f32.mrb[0].mxu0
    %1292 = vdwg.mxu0
    %1293 = vmatprep.subr.bf16.mxu0 %v537
    %1294 = vmatpush1.bf16.msra.mxu0 %v536
    %1295 = vmatprep.subr.bf16.mxu0 %v541
    %1296 = vmatpush1.bf16.msra.mxu0 %v540
    %1297 = vmatprep.subr.bf16.mxu0 %v545
    %1298 = vmatpush1.bf16.msra.mxu0 %v544
    %1299 = vmatprep.subr.bf16.mxu0 %v549
    %1300 = vmatpush1.bf16.msra.mxu0 %v548
    %1301 = vmatprep.subr.bf16.mxu0 %v553
    %1302 = vmatpush1.bf16.msra.mxu0 %v552
    %1303 = vmatprep.subr.bf16.mxu0 %v557
    %1304 = vmatpush1.bf16.msra.mxu0 %v556
    %1305 = vmatprep.subr.bf16.mxu0 %v561
    %1306 = vmatpush1.bf16.msra.mxu0 %v560
    %1307 = vmatprep.subr.bf16.mxu0 %v565
    %1308 = vmatpush1.bf16.msra.mxu0 %v564
    %1309 = vmatprep.subr.bf16.mxu0 0
    %1310 = vmatpush1.bf16.msra.mxu0 0
    %1311 = vmatprep.subr.bf16.mxu0 0
    %1312 = vmatpush1.bf16.msra.mxu0 0
    %1313 = vmatprep.subr.bf16.mxu0 0
    %1314 = vmatpush1.bf16.msra.mxu0 0
    %1315 = vmatprep.subr.bf16.mxu0 0
    %1316 = vmatpush1.bf16.msra.mxu0 0
    %1317 = vmatprep.subr.bf16.mxu0 0
    %1318 = vmatpush1.bf16.msra.mxu0 0
    %1319 = vmatprep.subr.bf16.mxu0 0
    %1320 = vmatpush1.bf16.msra.mxu0 0
    %1321 = vmatprep.subr.bf16.mxu0 0
    %1322 = vmatpush1.bf16.msra.mxu0 0
    %1323 = vmatprep.subr.bf16.mxu0 0
    %1324 = vmatpush1.bf16.msra.mxu0 0
    %1325 = vmatprep.mubr.bf16.mxu0 0
    %1326 = vmatmul.mubr.bf16.gmra.mrb[0].mxu0 %v1251
    %v1327 = vpop.f32.mrb[0].mxu0
    %v1328 = vadd.f32 0.0, %v1327
    %v1329 = vpop.f32.mrb[0].mxu0
    %v1330 = vadd.f32 0.0, %v1329
    %v1331 = vpop.f32.mrb[0].mxu0
    %v1332 = vpop.f32.mrb[0].mxu0
    %1333 = vdwg.mxu0
    %v1334 = vadd.f32 %v1247, %v1287
    %v1335 = vadd.f32 %v1248, %v1289
    %v1336 = vadd.f32 %v1249, %v1328
    %v1337 = vadd.f32 %v1250, %v1330
    %v1338 = vmul.f32 %v1334, 0.5
    %v1339 = vtanh.pop %v1338
    %v1340 = vadd.f32 %v1339, 1.0
    %v1341 = vmul.f32 %v1340, 0.5
    %v1342 = vmul.f32 %v1335, 0.5
    %v1343 = vtanh.pop %v1342
    %v1344 = vadd.f32 %v1343, 1.0
    %v1345 = vmul.f32 %v1344, 0.5
    %v1346 = vtanh.pop %v1336
    %v1347 = vmul.f32 %v1337, 0.5
    %v1348 = vtanh.pop %v1347
    %v1349 = vadd.f32 %v1348, 1.0
    %v1350 = vmul.f32 %v1349, 0.5
    %v1351 = vmul.f32 %v1345, %v1244
    %v1352 = vmul.f32 %v1341, %v1346
    %v1353 = vadd.f32 %v1351, %v1352
    %v1354 = vtanh.pop %v1353
    %v1355 = vmul.f32 %v1350, %v1354
    %s1356 = smul.u32 4, 16
    %s1357 = smul.u32 %s1356, 8
    %s1358 = sshll.u32 %s1357, 4
    %1359 = dma.done [#allocation4], %s1358
    %v1360 = vpack.c.bf16 %v1355, %v1355
    %v1361 = vld [vmem:[#allocation3] sm:$0xff]
    %v1362 = vld [vmem:[#allocation3 + $0x8] sm:$0xff]
    %v1363 = vld [vmem:[#allocation3 + $0x10] sm:$0xff]
    %v1364 = vld [vmem:[#allocation3 + $0x18] sm:$0xff]
    %v1365 = vld [vmem:[#allocation3 + $0x20] sm:$0xff]
    %v1366 = vld [vmem:[#allocation3 + $0x28] sm:$0xff]
    %v1367 = vld [vmem:[#allocation3 + $0x30] sm:$0xff]
    %v1368 = vld [vmem:[#allocation3 + $0x38] sm:$0xff]
    %v1369 = vld [vmem:[#allocation3 + $0x40] sm:$0xff]
    %v1370 = vld [vmem:[#allocation3 + $0x48] sm:$0xff]
    %v1371 = vld [vmem:[#allocation3 + $0x50] sm:$0xff]
    %v1372 = vld [vmem:[#allocation3 + $0x58] sm:$0xff]
    %v1373 = vld [vmem:[#allocation3 + $0x60] sm:$0xff]
    %v1374 = vld [vmem:[#allocation3 + $0x68] sm:$0xff]
    %v1375 = vld [vmem:[#allocation3 + $0x70] sm:$0xff]
    %v1376 = vld [vmem:[#allocation3 + $0x78] sm:$0xff]
    %v1377 = vld [vmem:[#allocation3 + $0x80] sm:$0xff]
    %v1378 = vld [vmem:[#allocation3 + $0x88] sm:$0xff]
    %v1379 = vld [vmem:[#allocation3 + $0x90] sm:$0xff]
    %v1380 = vld [vmem:[#allocation3 + $0x98] sm:$0xff]
    %v1381 = vld [vmem:[#allocation3 + $0xa0] sm:$0xff]
    %v1382 = vld [vmem:[#allocation3 + $0xa8] sm:$0xff]
    %v1383 = vld [vmem:[#allocation3 + $0xb0] sm:$0xff]
    %v1384 = vld [vmem:[#allocation3 + $0xb8] sm:$0xff]
    %v1385 = vld [vmem:[#allocation3 + $0xc0] sm:$0xff]
    %v1386 = vld [vmem:[#allocation3 + $0xc8] sm:$0xff]
    %v1387 = vld [vmem:[#allocation3 + $0xd0] sm:$0xff]
    %v1388 = vld [vmem:[#allocation3 + $0xd8] sm:$0xff]
    %v1389 = vld [vmem:[#allocation3 + $0xe0] sm:$0xff]
    %v1390 = vld [vmem:[#allocation3 + $0xe8] sm:$0xff]
    %v1391 = vld [vmem:[#allocation3 + $0xf0] sm:$0xff]
    %v1392 = vld [vmem:[#allocation3 + $0xf8] sm:$0xff]
    %v1393 = vld [vmem:[#allocation3 + $0x100] sm:$0xff]
    %v1394 = vld [vmem:[#allocation3 + $0x108] sm:$0xff]
    %v1395 = vld [vmem:[#allocation3 + $0x110] sm:$0xff]
    %v1396 = vld [vmem:[#allocation3 + $0x118] sm:$0xff]
    %v1397 = vld [vmem:[#allocation3 + $0x120] sm:$0xff]
    %v1398 = vld [vmem:[#allocation3 + $0x128] sm:$0xff]
    %v1399 = vld [vmem:[#allocation3 + $0x130] sm:$0xff]
    %v1400 = vld [vmem:[#allocation3 + $0x138] sm:$0xff]
    %v1401 = vld [vmem:[#allocation3 + $0x140] sm:$0xff]
    %v1402 = vld [vmem:[#allocation3 + $0x148] sm:$0xff]
    %v1403 = vld [vmem:[#allocation3 + $0x150] sm:$0xff]
    %v1404 = vld [vmem:[#allocation3 + $0x158] sm:$0xff]
    %v1405 = vld [vmem:[#allocation3 + $0x160] sm:$0xff]
    %v1406 = vld [vmem:[#allocation3 + $0x168] sm:$0xff]
    %v1407 = vld [vmem:[#allocation3 + $0x170] sm:$0xff]
    %v1408 = vld [vmem:[#allocation3 + $0x178] sm:$0xff]
    %v1409 = vld [vmem:[#allocation3 + $0x180] sm:$0xff]
    %v1410 = vld [vmem:[#allocation3 + $0x188] sm:$0xff]
    %v1411 = vld [vmem:[#allocation3 + $0x190] sm:$0xff]
    %v1412 = vld [vmem:[#allocation3 + $0x198] sm:$0xff]
    %v1413 = vld [vmem:[#allocation3 + $0x1a0] sm:$0xff]
    %v1414 = vld [vmem:[#allocation3 + $0x1a8] sm:$0xff]
    %v1415 = vld [vmem:[#allocation3 + $0x1b0] sm:$0xff]
    %v1416 = vld [vmem:[#allocation3 + $0x1b8] sm:$0xff]
    %v1417 = vld [vmem:[#allocation3 + $0x1c0] sm:$0xff]
    %v1418 = vld [vmem:[#allocation3 + $0x1c8] sm:$0xff]
    %v1419 = vld [vmem:[#allocation3 + $0x1d0] sm:$0xff]
    %v1420 = vld [vmem:[#allocation3 + $0x1d8] sm:$0xff]
    %v1421 = vld [vmem:[#allocation3 + $0x1e0] sm:$0xff]
    %v1422 = vld [vmem:[#allocation3 + $0x1e8] sm:$0xff]
    %v1423 = vld [vmem:[#allocation3 + $0x1f0] sm:$0xff]
    %v1424 = vld [vmem:[#allocation3 + $0x1f8] sm:$0xff]
    %v1425 = vld [vmem:[%s5] sm:$0xff]
    %v1427 = vlaneseq
    %v1428 = vshrl.u32 %v1427, 7
    %v1429 = vsub.s32 0, %v1428
    %v1430 = vrot.slane %v1425, %v1429
    %v1431 = vlaneseq
    %v1432 = vshrl.u32 %v1431, 7
    %v1433 = vsub.s32 1, %v1432
    %v1434 = vrot.slane %v1425, %v1433
    %v1435 = vlaneseq
    %v1436 = vshrl.u32 %v1435, 7
    %v1437 = vsub.s32 2, %v1436
    %v1438 = vrot.slane %v1425, %v1437
    %v1439 = vlaneseq
    %v1440 = vshrl.u32 %v1439, 7
    %v1441 = vsub.s32 3, %v1440
    %v1442 = vrot.slane %v1425, %v1441
    %v1443 = vlaneseq
    %v1444 = vshrl.u32 %v1443, 7
    %v1445 = vsub.s32 4, %v1444
    %v1446 = vrot.slane %v1425, %v1445
    %v1447 = vlaneseq
    %v1448 = vshrl.u32 %v1447, 7
    %v1449 = vsub.s32 5, %v1448
    %v1450 = vrot.slane %v1425, %v1449
    %v1451 = vlaneseq
    %v1452 = vshrl.u32 %v1451, 7
    %v1453 = vsub.s32 6, %v1452
    %v1454 = vrot.slane %v1425, %v1453
    %v1455 = vlaneseq
    %v1456 = vshrl.u32 %v1455, 7
    %v1457 = vsub.s32 7, %v1456
    %v1458 = vrot.slane %v1425, %v1457
    %1467 = vmatprep.subr.bf16.mxu0 %v1362
    %1468 = vmatpush1.bf16.msra.mxu0 %v1361
    %1469 = vmatprep.subr.bf16.mxu0 %v1370
    %1470 = vmatpush1.bf16.msra.mxu0 %v1369
    %1471 = vmatprep.subr.bf16.mxu0 %v1378
    %1472 = vmatpush1.bf16.msra.mxu0 %v1377
    %1473 = vmatprep.subr.bf16.mxu0 %v1386
    %1474 = vmatpush1.bf16.msra.mxu0 %v1385
    %1475 = vmatprep.subr.bf16.mxu0 %v1394
    %1476 = vmatpush1.bf16.msra.mxu0 %v1393
    %1477 = vmatprep.subr.bf16.mxu0 %v1402
    %1478 = vmatpush1.bf16.msra.mxu0 %v1401
    %1479 = vmatprep.subr.bf16.mxu0 %v1410
    %1480 = vmatpush1.bf16.msra.mxu0 %v1409
    %1481 = vmatprep.subr.bf16.mxu0 %v1418
    %1482 = vmatpush1.bf16.msra.mxu0 %v1417
    %1483 = vmatprep.subr.bf16.mxu0 0
    %1484 = vmatpush1.bf16.msra.mxu0 0
    %1485 = vmatprep.subr.bf16.mxu0 0
    %1486 = vmatpush1.bf16.msra.mxu0 0
    %1487 = vmatprep.subr.bf16.mxu0 0
    %1488 = vmatpush1.bf16.msra.mxu0 0
    %1489 = vmatprep.subr.bf16.mxu0 0
    %1490 = vmatpush1.bf16.msra.mxu0 0
    %1491 = vmatprep.subr.bf16.mxu0 0
    %1492 = vmatpush1.bf16.msra.mxu0 0
    %1493 = vmatprep.subr.bf16.mxu0 0
    %1494 = vmatpush1.bf16.msra.mxu0 0
    %1495 = vmatprep.subr.bf16.mxu0 0
    %1496 = vmatpush1.bf16.msra.mxu0 0
    %1497 = vmatprep.subr.bf16.mxu0 0
    %1498 = vmatpush1.bf16.msra.mxu0 0
    %1499 = vmatprep.mubr.bf16.mxu0 0
    %1500 = vmatmul.mubr.bf16.gmra.mrb[0].mxu0 %v1360
    %v1501 = vpop.f32.mrb[0].mxu0
    %v1502 = vadd.f32 %v1430, %v1501
    %v1503 = vpop.f32.mrb[0].mxu0
    %v1504 = vadd.f32 %v1434, %v1503
    %v1505 = vpop.f32.mrb[0].mxu0
    %v1506 = vpop.f32.mrb[0].mxu0
    %1507 = vdwg.mxu0
    %1508 = vmatprep.subr.bf16.mxu0 %v1364
    %1509 = vmatpush1.bf16.msra.mxu0 %v1363
    %1510 = vmatprep.subr.bf16.mxu0 %v1372
    %1511 = vmatpush1.bf16.msra.mxu0 %v1371
    %1512 = vmatprep.subr.bf16.mxu0 %v1380
    %1513 = vmatpush1.bf16.msra.mxu0 %v1379
    %1514 = vmatprep.subr.bf16.mxu0 %v1388
    %1515 = vmatpush1.bf16.msra.mxu0 %v1387
    %1516 = vmatprep.subr.bf16.mxu0 %v1396
    %1517 = vmatpush1.bf16.msra.mxu0 %v1395
    %1518 = vmatprep.subr.bf16.mxu0 %v1404
    %1519 = vmatpush1.bf16.msra.mxu0 %v1403
    %1520 = vmatprep.subr.bf16.mxu0 %v1412
    %1521 = vmatpush1.bf16.msra.mxu0 %v1411
    %1522 = vmatprep.subr.bf16.mxu0 %v1420
    %1523 = vmatpush1.bf16.msra.mxu0 %v1419
    %1524 = vmatprep.subr.bf16.mxu0 0
    %1525 = vmatpush1.bf16.msra.mxu0 0
    %1526 = vmatprep.subr.bf16.mxu0 0
    %1527 = vmatpush1.bf16.msra.mxu0 0
    %1528 = vmatprep.subr.bf16.mxu0 0
    %1529 = vmatpush1.bf16.msra.mxu0 0
    %1530 = vmatprep.subr.bf16.mxu0 0
    %1531 = vmatpush1.bf16.msra.mxu0 0
    %1532 = vmatprep.subr.bf16.mxu0 0
    %1533 = vmatpush1.bf16.msra.mxu0 0
    %1534 = vmatprep.subr.bf16.mxu0 0
    %1535 = vmatpush1.bf16.msra.mxu0 0
    %1536 = vmatprep.subr.bf16.mxu0 0
    %1537 = vmatpush1.bf16.msra.mxu0 0
    %1538 = vmatprep.subr.bf16.mxu0 0
    %1539 = vmatpush1.bf16.msra.mxu0 0
    %1540 = vmatprep.mubr.bf16.mxu0 0
    %1541 = vmatmul.mubr.bf16.gmra.mrb[0].mxu0 %v1360
    %v1542 = vpop.f32.mrb[0].mxu0
    %v1543 = vadd.f32 %v1438, %v1542
    %v1544 = vpop.f32.mrb[0].mxu0
    %v1545 = vadd.f32 %v1442, %v1544
    %v1546 = vpop.f32.mrb[0].mxu0
    %v1547 = vpop.f32.mrb[0].mxu0
    %1548 = vdwg.mxu0
    %1549 = vmatprep.subr.bf16.mxu0 %v1366
    %1550 = vmatpush1.bf16.msra.mxu0 %v1365
    %1551 = vmatprep.subr.bf16.mxu0 %v1374
    %1552 = vmatpush1.bf16.msra.mxu0 %v1373
    %1553 = vmatprep.subr.bf16.mxu0 %v1382
    %1554 = vmatpush1.bf16.msra.mxu0 %v1381
    %1555 = vmatprep.subr.bf16.mxu0 %v1390
    %1556 = vmatpush1.bf16.msra.mxu0 %v1389
    %1557 = vmatprep.subr.bf16.mxu0 %v1398
    %1558 = vmatpush1.bf16.msra.mxu0 %v1397
    %1559 = vmatprep.subr.bf16.mxu0 %v1406
    %1560 = vmatpush1.bf16.msra.mxu0 %v1405
    %1561 = vmatprep.subr.bf16.mxu0 %v1414
    %1562 = vmatpush1.bf16.msra.mxu0 %v1413
    %1563 = vmatprep.subr.bf16.mxu0 %v1422
    %1564 = vmatpush1.bf16.msra.mxu0 %v1421
    %1565 = vmatprep.subr.bf16.mxu0 0
    %1566 = vmatpush1.bf16.msra.mxu0 0
    %1567 = vmatprep.subr.bf16.mxu0 0
    %1568 = vmatpush1.bf16.msra.mxu0 0
    %1569 = vmatprep.subr.bf16.mxu0 0
    %1570 = vmatpush1.bf16.msra.mxu0 0
    %1571 = vmatprep.subr.bf16.mxu0 0
    %1572 = vmatpush1.bf16.msra.mxu0 0
    %1573 = vmatprep.subr.bf16.mxu0 0
    %1574 = vmatpush1.bf16.msra.mxu0 0
    %1575 = vmatprep.subr.bf16.mxu0 0
    %1576 = vmatpush1.bf16.msra.mxu0 0
    %1577 = vmatprep.subr.bf16.mxu0 0
    %1578 = vmatpush1.bf16.msra.mxu0 0
    %1579 = vmatprep.subr.bf16.mxu0 0
    %1580 = vmatpush1.bf16.msra.mxu0 0
    %1581 = vmatprep.mubr.bf16.mxu0 0
    %1582 = vmatmul.mubr.bf16.gmra.mrb[0].mxu0 %v1360
    %v1583 = vpop.f32.mrb[0].mxu0
    %v1584 = vadd.f32 %v1446, %v1583
    %v1585 = vpop.f32.mrb[0].mxu0
    %v1586 = vadd.f32 %v1450, %v1585
    %v1587 = vpop.f32.mrb[0].mxu0
    %v1588 = vpop.f32.mrb[0].mxu0
    %1589 = vdwg.mxu0
    %1590 = vmatprep.subr.bf16.mxu0 %v1368
    %1591 = vmatpush1.bf16.msra.mxu0 %v1367
    %1592 = vmatprep.subr.bf16.mxu0 %v1376
    %1593 = vmatpush1.bf16.msra.mxu0 %v1375
    %1594 = vmatprep.subr.bf16.mxu0 %v1384
    %1595 = vmatpush1.bf16.msra.mxu0 %v1383
    %1596 = vmatprep.subr.bf16.mxu0 %v1392
    %1597 = vmatpush1.bf16.msra.mxu0 %v1391
    %1598 = vmatprep.subr.bf16.mxu0 %v1400
    %1599 = vmatpush1.bf16.msra.mxu0 %v1399
    %1600 = vmatprep.subr.bf16.mxu0 %v1408
    %1601 = vmatpush1.bf16.msra.mxu0 %v1407
    %1602 = vmatprep.subr.bf16.mxu0 %v1416
    %1603 = vmatpush1.bf16.msra.mxu0 %v1415
    %1604 = vmatprep.subr.bf16.mxu0 %v1424
    %1605 = vmatpush1.bf16.msra.mxu0 %v1423
    %1606 = vmatprep.subr.bf16.mxu0 0
    %1607 = vmatpush1.bf16.msra.mxu0 0
    %1608 = vmatprep.subr.bf16.mxu0 0
    %1609 = vmatpush1.bf16.msra.mxu0 0
    %1610 = vmatprep.subr.bf16.mxu0 0
    %1611 = vmatpush1.bf16.msra.mxu0 0
    %1612 = vmatprep.subr.bf16.mxu0 0
    %1613 = vmatpush1.bf16.msra.mxu0 0
    %1614 = vmatprep.subr.bf16.mxu0 0
    %1615 = vmatpush1.bf16.msra.mxu0 0
    %1616 = vmatprep.subr.bf16.mxu0 0
    %1617 = vmatpush1.bf16.msra.mxu0 0
    %1618 = vmatprep.subr.bf16.mxu0 0
    %1619 = vmatpush1.bf16.msra.mxu0 0
    %1620 = vmatprep.subr.bf16.mxu0 0
    %1621 = vmatpush1.bf16.msra.mxu0 0
    %1622 = vmatprep.mubr.bf16.mxu0 0
    %1623 = vmatmul.mubr.bf16.gmra.mrb[0].mxu0 %v1360
    %v1624 = vpop.f32.mrb[0].mxu0
    %v1625 = vadd.f32 %v1454, %v1624
    %v1626 = vpop.f32.mrb[0].mxu0
    %v1627 = vadd.f32 %v1458, %v1626
    %v1628 = vpop.f32.mrb[0].mxu0
    %v1629 = vpop.f32.mrb[0].mxu0
    %1630 = vdwg.mxu0
    %vm1631 = vcmp.gt.f32.partialorder %v1502, 0.0
    %vm1632 = vcmp.gt.f32.partialorder %v1504, 0.0
    %vm1633 = vcmp.gt.f32.partialorder %v1543, 0.0
    %vm1634 = vcmp.gt.f32.partialorder %v1545, 0.0
    %vm1635 = vcmp.gt.f32.partialorder %v1584, 0.0
    %vm1636 = vcmp.gt.f32.partialorder %v1586, 0.0
    %vm1637 = vcmp.gt.f32.partialorder %v1625, 0.0
    %vm1638 = vcmp.gt.f32.partialorder %v1627, 0.0
    %v1639 = vmul.f32 %v1502, 0.1
    %v1640 = vmul.f32 %v1504, 0.1
    %v1641 = vmul.f32 %v1543, 0.1
    %v1642 = vmul.f32 %v1545, 0.1
    %v1643 = vmul.f32 %v1584, 0.1
    %v1644 = vmul.f32 %v1586, 0.1
    %v1645 = vmul.f32 %v1625, 0.1
    %v1646 = vmul.f32 %v1627, 0.1
    %v1647 = vsel %vm1631, %v1502, %v1639
    %v1648 = vsel %vm1632, %v1504, %v1640
    %v1649 = vsel %vm1633, %v1543, %v1641
    %v1650 = vsel %vm1634, %v1545, %v1642
    %v1651 = vsel %vm1635, %v1584, %v1643
    %v1652 = vsel %vm1636, %v1586, %v1644
    %v1653 = vsel %vm1637, %v1625, %v1645
    %v1654 = vsel %vm1638, %v1627, %v1646
    %v1655 = vld [vmem:[%s6] sm:$0xff]
    %v1657 = vlaneseq
    %v1658 = vshrl.u32 %v1657, 7
    %v1659 = vsub.s32 0, %v1658
    %v1660 = vrot.slane %v1655, %v1659
    %v1661 = vlaneseq
    %v1662 = vshrl.u32 %v1661, 7
    %v1663 = vsub.s32 1, %v1662
    %v1664 = vrot.slane %v1655, %v1663
    %v1665 = vlaneseq
    %v1666 = vshrl.u32 %v1665, 7
    %v1667 = vsub.s32 2, %v1666
    %v1668 = vrot.slane %v1655, %v1667
    %v1669 = vlaneseq
    %v1670 = vshrl.u32 %v1669, 7
    %v1671 = vsub.s32 3, %v1670
    %v1672 = vrot.slane %v1655, %v1671
    %v1673 = vlaneseq
    %v1674 = vshrl.u32 %v1673, 7
    %v1675 = vsub.s32 4, %v1674
    %v1676 = vrot.slane %v1655, %v1675
    %v1677 = vlaneseq
    %v1678 = vshrl.u32 %v1677, 7
    %v1679 = vsub.s32 5, %v1678
    %v1680 = vrot.slane %v1655, %v1679
    %v1681 = vlaneseq
    %v1682 = vshrl.u32 %v1681, 7
    %v1683 = vsub.s32 6, %v1682
    %v1684 = vrot.slane %v1655, %v1683
    %v1685 = vlaneseq
    %v1686 = vshrl.u32 %v1685, 7
    %v1687 = vsub.s32 7, %v1686
    %v1688 = vrot.slane %v1655, %v1687
    %v1697 = vmul.f32 %v1647, %v1660
    %v1698 = vmul.f32 %v1648, %v1664
    %v1699 = vmul.f32 %v1649, %v1668
    %v1700 = vmul.f32 %v1650, %v1672
    %v1701 = vmul.f32 %v1651, %v1676
    %v1702 = vmul.f32 %v1652, %v1680
    %v1703 = vmul.f32 %v1653, %v1684
    %v1704 = vmul.f32 %v1654, %v1688
    %v1705 = vadd.f32 %v1697, %v1698
    %v1706 = vadd.f32 %v1705, %v1699
    %v1707 = vadd.f32 %v1706, %v1700
    %v1708 = vadd.f32 %v1707, %v1701
    %v1709 = vadd.f32 %v1708, %v1702
    %v1710 = vadd.f32 %v1709, %v1703
    %v1711 = vadd.f32 %v1710, %v1704
    %1712 = vadd.xlane.f32.xlu0 %v1711
    %v1713 = vpop.xlane.xlu0 %1712
    %v1714 = vld [vmem:[#allocation5] sm:$0x1]
    %v1716 = vlaneseq
    %v1717 = vshrl.u32 %v1716, 7
    %v1718 = vsub.s32 0, %v1717
    %v1719 = vrot.slane %v1714, %v1718
    %v1721 = vadd.f32 %v1713, %v1719
    %v1722 = vxor.u32 %v1721, 2147483648
    %v1723 = vmul.f32 %v1722, 1.442695
    %v1724 = vpow.pop %v1723
    %v1725 = vadd.f32 %v1724, 1.0
    %v1726 = vrcp.pop %v1725
    %v1727 = vmul.f32 1.0, %v1726
    %vm1728 = vcmask 7168
    %1729 = vst.msk [vmem:[%s8] sm:$0xff] %vm1728, %v1727
    // Predicated region
    $region34: #{highway_discriminator_forward.1} parent=1 // pred_check
      _
    $region35: #{highway_discriminator_forward.1} parent=1 // pred_check_branch
      %1731 = sbr.rel (0) target = $region37
    $region36: #{highway_discriminator_forward.1} parent=1 // pred_region
      _
    $region37: #{highway_discriminator_forward.1} parent=1 // pred_fallthru
      _
    // Predicated region
    $region38: #{highway_discriminator_forward.1} parent=1 // pred_check
      _
    $region39: #{highway_discriminator_forward.1} parent=1 // pred_check_branch
      %1733 = sbr.rel (0) target = $region41
    $region40: #{highway_discriminator_forward.1} parent=1 // pred_region
      _
    $region41: #{highway_discriminator_forward.1} parent=1 // pred_fallthru
      _
    %1734 = vsyncpa [#allocation7], 1
  %1735 = vsyncmov [#allocation4]
  %s1736 = vpop.sfrf %1735
  %p1737 = scmp.eq.s32.totalorder %s1736, 0
  %p1738 = pneg %p1737
  %1740 = shalt.err (%p1738)

</llo_original>
